<compile_context>
chip_gen: v6e
topology: v6e:2x2x1
jax: 0.10.0
libtpu: 0.0.40
codegen_flags: <defaults>
</compile_context>

<pallas_src>
import math

import jax
import jax.numpy as jnp
import numpy as np
from jax import lax
from jax.experimental import pallas as pl
from jax.experimental.pallas import tpu as pltpu


# ----------------------------------------------------------------------------
# Kernel
# ----------------------------------------------------------------------------
def _make_kernel(B_TILE, T, D_in, H, O, depth):
    M = B_TILE * T
    inv_sqrt2 = 1.0 / math.sqrt(2.0)

    def gelu(v):
        # exact (erf-based) GELU, matching torch.nn.functional.gelu default
        return 0.5 * v * (1.0 + lax.erf(v * inv_sqrt2))

    def dilated_conv(g2, w_packed, b, d, c_in):
        # g2: (M, c_in) -- conv input (already GELU'd); Conv1d zero-pads it.
        # w_packed: (3*c_in, c_out) with taps stacked row-major (tap, ci).
        # Conv1d(kernel=3, dilation=d, padding=d):
        #   y[b, t] = b + sum_k g[b, t + (k-1)*d] @ W_k
        g3 = g2.reshape(B_TILE, T, c_in)
        zpad = jnp.zeros((B_TILE, d, c_in), jnp.float32)
        gp = jnp.concatenate([zpad, g3, zpad], axis=1)       # (B_TILE, T+2d, c_in)
        # Three time-shifted views, fused along channels -> one MXU matmul.
        taps = jnp.concatenate(
            [gp[:, k * d:k * d + T, :] for k in range(3)], axis=-1)
        y = jnp.dot(taps.reshape(M, 3 * c_in), w_packed,
                    preferred_element_type=jnp.float32)
        return y + b                                          # (M, c_out)

    def kernel(x_ref, lw_ref, lb_ref, cw_ref, cb_ref,
               fw1_ref, fb1_ref, fw2_ref, fb2_ref, rw_ref, rb_ref, o_ref):
        # (B_TILE, T, D_in) -> flatten batch+time so every matmul sees M rows.
        x = x_ref[...].reshape(M, D_in)

        # nan_mask = ~x.isnan().any(axis=-1);  x[~nan_mask] = 0
        row_valid = jnp.logical_not(
            jnp.any(x != x, axis=-1, keepdims=True))          # (M, 1), hoisted
        x = jnp.where(row_valid, x, 0.0)

        # linear projector
        h = jnp.dot(x, lw_ref[...],
                    preferred_element_type=jnp.float32) + lb_ref[...]

        # eval mode: mask = all-True & nan_mask  =>  zero the NaN rows again
        h = jnp.where(row_valid, h, 0.0)                      # (M, H)

        # dilated conv blocks (hidden -> hidden), dilation = 2**i
        for i in range(depth):
            d = 2 ** i
            res = h
            c1 = dilated_conv(gelu(h), cw_ref[i, 0], cb_ref[i, 0], d, H)
            c2 = dilated_conv(gelu(c1), cw_ref[i, 1], cb_ref[i, 1], d, H)
            h = c2 + res

        # final block (hidden -> output_dims), dilation = 2**depth,
        # with 1x1-conv residual projector
        d = 2 ** depth
        res = jnp.dot(h, rw_ref[...],
                      preferred_element_type=jnp.float32) + rb_ref[...]
        c1 = dilated_conv(gelu(h), fw1_ref[...], fb1_ref[...], d, H)
        c2 = dilated_conv(gelu(c1), fw2_ref[...], fb2_ref[...], d, O)
        h = c2 + res                                          # (M, O)

        o_ref[...] = h.reshape(B_TILE, T, O)

    return kernel


# ----------------------------------------------------------------------------
# Wrapper
# ----------------------------------------------------------------------------
def _pick_b_tile(B, T, max_rows=512):
    """Largest divisor of B with B_TILE*T <= max_rows (fills the MXU rows)."""
    best = 1
    for cand in range(1, B + 1):
        if B % cand == 0 and cand * T <= max(max_rows, T):
            best = cand
    return best


def fcacc_encoder_forward(x, params, *, hidden_dims, output_dims, depth):
    B, T, D_in = x.shape
    H, O = hidden_dims, output_dims
    B_TILE = _pick_b_tile(B, T)
    kernel = _make_kernel(B_TILE, T, D_in, H, O, depth)

    # Host-side weight packing: stack the 3 conv taps along the contraction
    # dim so each conv becomes a single (M, 3*Cin) @ (3*Cin, Cout) matmul.
    packed = {
        "lin_w": params["lin_w"],                                   # (D_in, H)
        "lin_b": params["lin_b"],                                   # (1, H)
        "convs_w": params["convs_w"].reshape(depth, 2, 3 * H, H),   # (d,2,3H,H)
        "convs_b": params["convs_b"],                               # (d,2,1,H)
        "fin_w1": params["fin_w1"].reshape(3 * H, O),               # (3H, O)
        "fin_b1": params["fin_b1"],                                 # (1, O)
        "fin_w2": params["fin_w2"].reshape(3 * O, O),               # (3O, O)
        "fin_b2": params["fin_b2"],                                 # (1, O)
        "res_w": params["res_w"],                                   # (H, O)
        "res_b": params["res_b"],                                   # (1, O)
    }
    names = ["lin_w", "lin_b", "convs_w", "convs_b", "fin_w1", "fin_b1",
             "fin_w2", "fin_b2", "res_w", "res_b"]

    def full(arr):
        zeros = (0,) * arr.ndim
        return pl.BlockSpec(arr.shape, lambda b: zeros)  # constant index_map:
        # weights are DMA'd once and stay VMEM-resident across grid steps.

    return pl.pallas_call(
        kernel,
        out_shape=jax.ShapeDtypeStruct((B, T, O), jnp.float32),
        grid=(B // B_TILE,),
        in_specs=[pl.BlockSpec((B_TILE, T, D_in), lambda b: (b, 0, 0))]
                 + [full(packed[n]) for n in names],
        out_specs=pl.BlockSpec((B_TILE, T, O), lambda b: (b, 0, 0)),
        compiler_params=pltpu.CompilerParams(
            dimension_semantics=("parallel",),
            vmem_limit_bytes=64 * 1024 * 1024),
    )(x, *[packed[n] for n in names])


# ----------------------------------------------------------------------------
# Deterministic parameter init (synthetic weights, "natural" tap layout)
# ----------------------------------------------------------------------------
def init_params(key, input_dims, hidden_dims, output_dims, depth):
    H, O = hidden_dims, output_dims
    ks = jax.random.split(key, 12)
    n = lambda k, shape, s=0.1: (s * jax.random.normal(k, shape)).astype(
        jnp.float32)
    return {
        "lin_w": n(ks[0], (input_dims, H)),
        "lin_b": n(ks[1], (1, H), 0.01),
        # (block, which_conv, tap, Cin, Cout)
        "convs_w": n(ks[2], (depth, 2, 3, H, H)),
        "convs_b": n(ks[3], (depth, 2, 1, H), 0.01),
        "fin_w1": n(ks[4], (3, H, O)),
        "fin_b1": n(ks[5], (1, O), 0.01),
        "fin_w2": n(ks[6], (3, O, O)),
        "fin_b2": n(ks[7], (1, O), 0.01),
        "res_w": n(ks[8], (H, O)),
        "res_b": n(ks[9], (1, O), 0.01),
    }


# ----------------------------------------------------------------------------
# Pure-JAX reference (uses lax.conv_general_dilated) for validation
# ----------------------------------------------------------------------------
def reference_forward(x, params, *, hidden_dims, output_dims, depth):
    def gelu(v):
        return jax.nn.gelu(v, approximate=False)

    def conv1d(h, w3, b, d):
        # h: (B, T, Cin), w3: (3, Cin, Cout)
        out = lax.conv_general_dilated(
            h, w3, window_strides=(1,), padding=[(d, d)],
            rhs_dilation=(d,), dimension_numbers=("NWC", "WIO", "NWC"))
        return out + b[None]

    row_valid = ~jnp.any(jnp.isnan(x), axis=-1, keepdims=True)
    x = jnp.where(row_valid, x, 0.0)
    h = x @ params["lin_w"] + params["lin_b"]
    h = jnp.where(row_valid, h, 0.0)

    for i in range(depth):
        d = 2 ** i
        res = h
        g = gelu(h)
        c1 = conv1d(g, params["convs_w"][i, 0], params["convs_b"][i, 0], d)
        c2 = conv1d(gelu(c1), params["convs_w"][i, 1],
                    params["convs_b"][i, 1], d)
        h = c2 + res

    d = 2 ** depth
    res = h @ params["res_w"] + params["res_b"]
    g = gelu(h)
    c1 = conv1d(g, params["fin_w1"], params["fin_b1"], d)
    c2 = conv1d(gelu(c1), params["fin_w2"], params["fin_b2"], d)
    return c2 + res


# ----------------------------------------------------------------------------
if __name__ == "__main__":
    B, T = 2, 16
    input_dims, hidden_dims, output_dims, depth = 8, 32, 16, 3

    key = jax.random.PRNGKey(0)
    kx, kp = jax.random.split(key)
    x = jax.random.normal(kx, (B, T, input_dims), dtype=jnp.float32)
    # inject NaNs to exercise the nan-mask path
    x = x.at[0, 3, 2].set(jnp.nan)
    x = x.at[1, 0, :].set(jnp.nan)

    params = init_params(kp, input_dims, hidden_dims, output_dims, depth)

    out = fcacc_encoder_forward(
        x, params, hidden_dims=hidden_dims, output_dims=output_dims,
        depth=depth)
    out = jax.block_until_ready(out)

    ref = reference_forward(
        x, params, hidden_dims=hidden_dims, output_dims=output_dims,
        depth=depth)
    ref = jax.block_until_ready(ref)

    assert out.shape == (B, T, output_dims)
    np.testing.assert_allclose(np.asarray(out), np.asarray(ref),
                               rtol=1e-2, atol=1e-2)
    print("KERNEL_OK")
</pallas_src>

<mosaic_0001>
module attributes {stable_mosaic.version = 11 : i64} {
  func.func @kernel(%arg0: i32, %arg1: memref<2x16x8xf32, #tpu.memory_space<vmem>>, %arg2: memref<8x32xf32, #tpu.memory_space<vmem>>, %arg3: memref<1x32xf32, #tpu.memory_space<vmem>>, %arg4: memref<3x2x96x32xf32, #tpu.memory_space<vmem>>, %arg5: memref<3x2x1x32xf32, #tpu.memory_space<vmem>>, %arg6: memref<96x16xf32, #tpu.memory_space<vmem>>, %arg7: memref<1x16xf32, #tpu.memory_space<vmem>>, %arg8: memref<48x16xf32, #tpu.memory_space<vmem>>, %arg9: memref<1x16xf32, #tpu.memory_space<vmem>>, %arg10: memref<32x16xf32, #tpu.memory_space<vmem>>, %arg11: memref<1x16xf32, #tpu.memory_space<vmem>>, %arg12: memref<2x16x16xf32, #tpu.memory_space<vmem>>) attributes {dimension_semantics = [#tpu.dimension_semantics<parallel>], iteration_bounds = array<i64: 1>, scalar_prefetch = 0 : i64, scratch_operands = 0 : i64, tpu.core_type = #tpu.core_type<tc>, window_params = [{transform_indices = @transform_0, window_bounds = array<i64: 2, 16, 8>}, {pipeline_mode = #tpu.pipeline_mode<synchronous>, transform_indices = @transform_1, window_bounds = array<i64: 8, 32>}, {pipeline_mode = #tpu.pipeline_mode<synchronous>, transform_indices = @transform_2, window_bounds = array<i64: 1, 32>}, {pipeline_mode = #tpu.pipeline_mode<synchronous>, transform_indices = @transform_3, window_bounds = array<i64: 3, 2, 96, 32>}, {pipeline_mode = #tpu.pipeline_mode<synchronous>, transform_indices = @transform_4, window_bounds = array<i64: 3, 2, 1, 32>}, {pipeline_mode = #tpu.pipeline_mode<synchronous>, transform_indices = @transform_5, window_bounds = array<i64: 96, 16>}, {pipeline_mode = #tpu.pipeline_mode<synchronous>, transform_indices = @transform_6, window_bounds = array<i64: 1, 16>}, {pipeline_mode = #tpu.pipeline_mode<synchronous>, transform_indices = @transform_7, window_bounds = array<i64: 48, 16>}, {pipeline_mode = #tpu.pipeline_mode<synchronous>, transform_indices = @transform_8, window_bounds = array<i64: 1, 16>}, {pipeline_mode = #tpu.pipeline_mode<synchronous>, transform_indices = @transform_9, window_bounds = array<i64: 32, 16>}, {pipeline_mode = #tpu.pipeline_mode<synchronous>, transform_indices = @transform_10, window_bounds = array<i64: 1, 16>}, {transform_indices = @transform_11, window_bounds = array<i64: 2, 16, 16>}]} {
    %c0 = arith.constant 0 : index
    %c0_0 = arith.constant 0 : index
    %c0_1 = arith.constant 0 : index
    %0 = vector.load %arg1[%c0, %c0_0, %c0_1] : memref<2x16x8xf32, #tpu.memory_space<vmem>>, vector<2x16x8xf32>
    %1 = vector.shape_cast %0 : vector<2x16x8xf32> to vector<32x8xf32>
    %2 = arith.cmpf one, %1, %1 : vector<32x8xf32>
    %cst = arith.constant 1.000000e+00 : f32
    %cst_2 = arith.constant 0.000000e+00 : f32
    %3 = vector.broadcast %cst : f32 to vector<32x8xf32>
    %4 = vector.broadcast %cst_2 : f32 to vector<32x8xf32>
    %5 = arith.select %2, %3, %4 : vector<32x8xi1>, vector<32x8xf32>
    %cst_3 = arith.constant dense<0xFF800000> : vector<32xf32>
    %6 = vector.multi_reduction <maximumf>, %5, %cst_3 [1] : vector<32x8xf32> to vector<32xf32>
    %cst_4 = arith.constant 0.000000e+00 : f32
    %7 = vector.broadcast %cst_4 : f32 to vector<32xf32>
    %8 = arith.cmpf ogt, %6, %7 : vector<32xf32>
    %9 = vector.shape_cast %8 : vector<32xi1> to vector<32x1xi1>
    %cst_5 = arith.constant dense<true> : vector<32x1xi1>
    %10 = arith.xori %9, %cst_5 : vector<32x1xi1>
    %cst_6 = arith.constant 0.000000e+00 : f32
    %11 = vector.shape_cast %10 : vector<32x1xi1> to vector<32x1xi1>
    %12 = vector.broadcast %11 : vector<32x1xi1> to vector<32x8xi1>
    %13 = vector.broadcast %cst_6 : f32 to vector<32x8xf32>
    %14 = arith.select %12, %1, %13 : vector<32x8xi1>, vector<32x8xf32>
    %c0_7 = arith.constant 0 : index
    %c0_8 = arith.constant 0 : index
    %15 = vector.load %arg2[%c0_7, %c0_8] : memref<8x32xf32, #tpu.memory_space<vmem>>, vector<8x32xf32>
    %cst_9 = arith.constant dense<0.000000e+00> : vector<32x32xf32>
    %16 = tpu.matmul %14, %15, %cst_9 {dimension_numbers = #tpu.dot_dimension_numbers<[1], [0], [0], [1], [0, 0, 1, 1], [], []>} : vector<32x8xf32>, vector<8x32xf32>, vector<32x32xf32> -> vector<32x32xf32>
    %c0_10 = arith.constant 0 : index
    %c0_11 = arith.constant 0 : index
    %17 = vector.load %arg3[%c0_10, %c0_11] : memref<1x32xf32, #tpu.memory_space<vmem>>, vector<1x32xf32>
    %18 = vector.broadcast %17 : vector<1x32xf32> to vector<32x32xf32>
    %19 = arith.addf %16, %18 : vector<32x32xf32>
    %cst_12 = arith.constant 0.000000e+00 : f32
    %20 = vector.shape_cast %10 : vector<32x1xi1> to vector<32x1xi1>
    %21 = vector.broadcast %20 : vector<32x1xi1> to vector<32x32xi1>
    %22 = vector.broadcast %cst_12 : f32 to vector<32x32xf32>
    %23 = arith.select %21, %19, %22 : vector<32x32xi1>, vector<32x32xf32>
    %cst_13 = arith.constant 5.000000e-01 : f32
    %24 = vector.broadcast %cst_13 : f32 to vector<32x32xf32>
    %25 = arith.mulf %24, %23 : vector<32x32xf32>
    %cst_14 = arith.constant 0.707106769 : f32
    %26 = vector.broadcast %cst_14 : f32 to vector<32x32xf32>
    %27 = arith.mulf %23, %26 : vector<32x32xf32>
    %28 = math.erf %27 : vector<32x32xf32>
    %cst_15 = arith.constant 1.000000e+00 : f32
    %29 = vector.broadcast %cst_15 : f32 to vector<32x32xf32>
    %30 = arith.addf %29, %28 : vector<32x32xf32>
    %31 = arith.mulf %25, %30 : vector<32x32xf32>
    %c0_16 = arith.constant 0 : index
    %c0_17 = arith.constant 0 : index
    %c0_18 = arith.constant 0 : index
    %c0_19 = arith.constant 0 : index
    %32 = vector.load %arg4[%c0_16, %c0_17, %c0_18, %c0_19] : memref<3x2x96x32xf32, #tpu.memory_space<vmem>>, vector<1x1x96x32xf32>
    %33 = vector.shape_cast %32 : vector<1x1x96x32xf32> to vector<96x32xf32>
    %c0_20 = arith.constant 0 : index
    %c0_21 = arith.constant 0 : index
    %c0_22 = arith.constant 0 : index
    %c0_23 = arith.constant 0 : index
    %34 = vector.load %arg5[%c0_20, %c0_21, %c0_22, %c0_23] : memref<3x2x1x32xf32, #tpu.memory_space<vmem>>, vector<1x1x1x32xf32>
    %35 = vector.shape_cast %34 : vector<1x1x1x32xf32> to vector<1x32xf32>
    %36 = vector.shape_cast %31 : vector<32x32xf32> to vector<2x16x32xf32>
    %cst_24 = arith.constant 0.000000e+00 : f32
    %37 = vector.broadcast %cst_24 : f32 to vector<2x1x32xf32>
    %38 = tpu.concatenate %37, %36, %37 in 1 : vector<2x1x32xf32>, vector<2x16x32xf32>, vector<2x1x32xf32> -> vector<2x18x32xf32>
    %39 = vector.extract_strided_slice %38 {offsets = [0, 0, 0], sizes = [2, 16, 32], strides = [1, 1, 1]} : vector<2x18x32xf32> to vector<2x16x32xf32>
    %40 = vector.extract_strided_slice %38 {offsets = [0, 1, 0], sizes = [2, 16, 32], strides = [1, 1, 1]} : vector<2x18x32xf32> to vector<2x16x32xf32>
    %41 = vector.extract_strided_slice %38 {offsets = [0, 2, 0], sizes = [2, 16, 32], strides = [1, 1, 1]} : vector<2x18x32xf32> to vector<2x16x32xf32>
    %42 = tpu.concatenate %39, %40, %41 in 2 : vector<2x16x32xf32>, vector<2x16x32xf32>, vector<2x16x32xf32> -> vector<2x16x96xf32>
    %43 = vector.shape_cast %42 : vector<2x16x96xf32> to vector<32x96xf32>
    %cst_25 = arith.constant dense<0.000000e+00> : vector<32x32xf32>
    %44 = tpu.matmul %43, %33, %cst_25 {dimension_numbers = #tpu.dot_dimension_numbers<[1], [0], [0], [1], [0, 0, 1, 1], [], []>} : vector<32x96xf32>, vector<96x32xf32>, vector<32x32xf32> -> vector<32x32xf32>
    %45 = vector.broadcast %35 : vector<1x32xf32> to vector<32x32xf32>
    %46 = arith.addf %44, %45 : vector<32x32xf32>
    %cst_26 = arith.constant 5.000000e-01 : f32
    %47 = vector.broadcast %cst_26 : f32 to vector<32x32xf32>
    %48 = arith.mulf %47, %46 : vector<32x32xf32>
    %cst_27 = arith.constant 0.707106769 : f32
    %49 = vector.broadcast %cst_27 : f32 to vector<32x32xf32>
    %50 = arith.mulf %46, %49 : vector<32x32xf32>
    %51 = math.erf %50 : vector<32x32xf32>
    %cst_28 = arith.constant 1.000000e+00 : f32
    %52 = vector.broadcast %cst_28 : f32 to vector<32x32xf32>
    %53 = arith.addf %52, %51 : vector<32x32xf32>
    %54 = arith.mulf %48, %53 : vector<32x32xf32>
    %c0_29 = arith.constant 0 : index
    %c1 = arith.constant 1 : index
    %c0_30 = arith.constant 0 : index
    %c0_31 = arith.constant 0 : index
    %55 = vector.load %arg4[%c0_29, %c1, %c0_30, %c0_31] : memref<3x2x96x32xf32, #tpu.memory_space<vmem>>, vector<1x1x96x32xf32>
    %56 = vector.shape_cast %55 : vector<1x1x96x32xf32> to vector<96x32xf32>
    %c0_32 = arith.constant 0 : index
    %c1_33 = arith.constant 1 : index
    %c0_34 = arith.constant 0 : index
    %c0_35 = arith.constant 0 : index
    %57 = vector.load %arg5[%c0_32, %c1_33, %c0_34, %c0_35] : memref<3x2x1x32xf32, #tpu.memory_space<vmem>>, vector<1x1x1x32xf32>
    %58 = vector.shape_cast %57 : vector<1x1x1x32xf32> to vector<1x32xf32>
    %59 = vector.shape_cast %54 : vector<32x32xf32> to vector<2x16x32xf32>
    %cst_36 = arith.constant 0.000000e+00 : f32
    %60 = vector.broadcast %cst_36 : f32 to vector<2x1x32xf32>
    %61 = tpu.concatenate %60, %59, %60 in 1 : vector<2x1x32xf32>, vector<2x16x32xf32>, vector<2x1x32xf32> -> vector<2x18x32xf32>
    %62 = vector.extract_strided_slice %61 {offsets = [0, 0, 0], sizes = [2, 16, 32], strides = [1, 1, 1]} : vector<2x18x32xf32> to vector<2x16x32xf32>
    %63 = vector.extract_strided_slice %61 {offsets = [0, 1, 0], sizes = [2, 16, 32], strides = [1, 1, 1]} : vector<2x18x32xf32> to vector<2x16x32xf32>
    %64 = vector.extract_strided_slice %61 {offsets = [0, 2, 0], sizes = [2, 16, 32], strides = [1, 1, 1]} : vector<2x18x32xf32> to vector<2x16x32xf32>
    %65 = tpu.concatenate %62, %63, %64 in 2 : vector<2x16x32xf32>, vector<2x16x32xf32>, vector<2x16x32xf32> -> vector<2x16x96xf32>
    %66 = vector.shape_cast %65 : vector<2x16x96xf32> to vector<32x96xf32>
    %cst_37 = arith.constant dense<0.000000e+00> : vector<32x32xf32>
    %67 = tpu.matmul %66, %56, %cst_37 {dimension_numbers = #tpu.dot_dimension_numbers<[1], [0], [0], [1], [0, 0, 1, 1], [], []>} : vector<32x96xf32>, vector<96x32xf32>, vector<32x32xf32> -> vector<32x32xf32>
    %68 = vector.broadcast %58 : vector<1x32xf32> to vector<32x32xf32>
    %69 = arith.addf %67, %68 : vector<32x32xf32>
    %70 = arith.addf %69, %23 : vector<32x32xf32>
    %cst_38 = arith.constant 5.000000e-01 : f32
    %71 = vector.broadcast %cst_38 : f32 to vector<32x32xf32>
    %72 = arith.mulf %71, %70 : vector<32x32xf32>
    %cst_39 = arith.constant 0.707106769 : f32
    %73 = vector.broadcast %cst_39 : f32 to vector<32x32xf32>
    %74 = arith.mulf %70, %73 : vector<32x32xf32>
    %75 = math.erf %74 : vector<32x32xf32>
    %cst_40 = arith.constant 1.000000e+00 : f32
    %76 = vector.broadcast %cst_40 : f32 to vector<32x32xf32>
    %77 = arith.addf %76, %75 : vector<32x32xf32>
    %78 = arith.mulf %72, %77 : vector<32x32xf32>
    %c1_41 = arith.constant 1 : index
    %c0_42 = arith.constant 0 : index
    %c0_43 = arith.constant 0 : index
    %c0_44 = arith.constant 0 : index
    %79 = vector.load %arg4[%c1_41, %c0_42, %c0_43, %c0_44] : memref<3x2x96x32xf32, #tpu.memory_space<vmem>>, vector<1x1x96x32xf32>
    %80 = vector.shape_cast %79 : vector<1x1x96x32xf32> to vector<96x32xf32>
    %c1_45 = arith.constant 1 : index
    %c0_46 = arith.constant 0 : index
    %c0_47 = arith.constant 0 : index
    %c0_48 = arith.constant 0 : index
    %81 = vector.load %arg5[%c1_45, %c0_46, %c0_47, %c0_48] : memref<3x2x1x32xf32, #tpu.memory_space<vmem>>, vector<1x1x1x32xf32>
    %82 = vector.shape_cast %81 : vector<1x1x1x32xf32> to vector<1x32xf32>
    %83 = vector.shape_cast %78 : vector<32x32xf32> to vector<2x16x32xf32>
    %cst_49 = arith.constant 0.000000e+00 : f32
    %84 = vector.broadcast %cst_49 : f32 to vector<2x2x32xf32>
    %85 = tpu.concatenate %84, %83, %84 in 1 : vector<2x2x32xf32>, vector<2x16x32xf32>, vector<2x2x32xf32> -> vector<2x20x32xf32>
    %86 = vector.extract_strided_slice %85 {offsets = [0, 0, 0], sizes = [2, 16, 32], strides = [1, 1, 1]} : vector<2x20x32xf32> to vector<2x16x32xf32>
    %87 = vector.extract_strided_slice %85 {offsets = [0, 2, 0], sizes = [2, 16, 32], strides = [1, 1, 1]} : vector<2x20x32xf32> to vector<2x16x32xf32>
    %88 = vector.extract_strided_slice %85 {offsets = [0, 4, 0], sizes = [2, 16, 32], strides = [1, 1, 1]} : vector<2x20x32xf32> to vector<2x16x32xf32>
    %89 = tpu.concatenate %86, %87, %88 in 2 : vector<2x16x32xf32>, vector<2x16x32xf32>, vector<2x16x32xf32> -> vector<2x16x96xf32>
    %90 = vector.shape_cast %89 : vector<2x16x96xf32> to vector<32x96xf32>
    %cst_50 = arith.constant dense<0.000000e+00> : vector<32x32xf32>
    %91 = tpu.matmul %90, %80, %cst_50 {dimension_numbers = #tpu.dot_dimension_numbers<[1], [0], [0], [1], [0, 0, 1, 1], [], []>} : vector<32x96xf32>, vector<96x32xf32>, vector<32x32xf32> -> vector<32x32xf32>
    %92 = vector.broadcast %82 : vector<1x32xf32> to vector<32x32xf32>
    %93 = arith.addf %91, %92 : vector<32x32xf32>
    %cst_51 = arith.constant 5.000000e-01 : f32
    %94 = vector.broadcast %cst_51 : f32 to vector<32x32xf32>
    %95 = arith.mulf %94, %93 : vector<32x32xf32>
    %cst_52 = arith.constant 0.707106769 : f32
    %96 = vector.broadcast %cst_52 : f32 to vector<32x32xf32>
    %97 = arith.mulf %93, %96 : vector<32x32xf32>
    %98 = math.erf %97 : vector<32x32xf32>
    %cst_53 = arith.constant 1.000000e+00 : f32
    %99 = vector.broadcast %cst_53 : f32 to vector<32x32xf32>
    %100 = arith.addf %99, %98 : vector<32x32xf32>
    %101 = arith.mulf %95, %100 : vector<32x32xf32>
    %c1_54 = arith.constant 1 : index
    %c1_55 = arith.constant 1 : index
    %c0_56 = arith.constant 0 : index
    %c0_57 = arith.constant 0 : index
    %102 = vector.load %arg4[%c1_54, %c1_55, %c0_56, %c0_57] : memref<3x2x96x32xf32, #tpu.memory_space<vmem>>, vector<1x1x96x32xf32>
    %103 = vector.shape_cast %102 : vector<1x1x96x32xf32> to vector<96x32xf32>
    %c1_58 = arith.constant 1 : index
    %c1_59 = arith.constant 1 : index
    %c0_60 = arith.constant 0 : index
    %c0_61 = arith.constant 0 : index
    %104 = vector.load %arg5[%c1_58, %c1_59, %c0_60, %c0_61] : memref<3x2x1x32xf32, #tpu.memory_space<vmem>>, vector<1x1x1x32xf32>
    %105 = vector.shape_cast %104 : vector<1x1x1x32xf32> to vector<1x32xf32>
    %106 = vector.shape_cast %101 : vector<32x32xf32> to vector<2x16x32xf32>
    %cst_62 = arith.constant 0.000000e+00 : f32
    %107 = vector.broadcast %cst_62 : f32 to vector<2x2x32xf32>
    %108 = tpu.concatenate %107, %106, %107 in 1 : vector<2x2x32xf32>, vector<2x16x32xf32>, vector<2x2x32xf32> -> vector<2x20x32xf32>
    %109 = vector.extract_strided_slice %108 {offsets = [0, 0, 0], sizes = [2, 16, 32], strides = [1, 1, 1]} : vector<2x20x32xf32> to vector<2x16x32xf32>
    %110 = vector.extract_strided_slice %108 {offsets = [0, 2, 0], sizes = [2, 16, 32], strides = [1, 1, 1]} : vector<2x20x32xf32> to vector<2x16x32xf32>
    %111 = vector.extract_strided_slice %108 {offsets = [0, 4, 0], sizes = [2, 16, 32], strides = [1, 1, 1]} : vector<2x20x32xf32> to vector<2x16x32xf32>
    %112 = tpu.concatenate %109, %110, %111 in 2 : vector<2x16x32xf32>, vector<2x16x32xf32>, vector<2x16x32xf32> -> vector<2x16x96xf32>
    %113 = vector.shape_cast %112 : vector<2x16x96xf32> to vector<32x96xf32>
    %cst_63 = arith.constant dense<0.000000e+00> : vector<32x32xf32>
    %114 = tpu.matmul %113, %103, %cst_63 {dimension_numbers = #tpu.dot_dimension_numbers<[1], [0], [0], [1], [0, 0, 1, 1], [], []>} : vector<32x96xf32>, vector<96x32xf32>, vector<32x32xf32> -> vector<32x32xf32>
    %115 = vector.broadcast %105 : vector<1x32xf32> to vector<32x32xf32>
    %116 = arith.addf %114, %115 : vector<32x32xf32>
    %117 = arith.addf %116, %70 : vector<32x32xf32>
    %cst_64 = arith.constant 5.000000e-01 : f32
    %118 = vector.broadcast %cst_64 : f32 to vector<32x32xf32>
    %119 = arith.mulf %118, %117 : vector<32x32xf32>
    %cst_65 = arith.constant 0.707106769 : f32
    %120 = vector.broadcast %cst_65 : f32 to vector<32x32xf32>
    %121 = arith.mulf %117, %120 : vector<32x32xf32>
    %122 = math.erf %121 : vector<32x32xf32>
    %cst_66 = arith.constant 1.000000e+00 : f32
    %123 = vector.broadcast %cst_66 : f32 to vector<32x32xf32>
    %124 = arith.addf %123, %122 : vector<32x32xf32>
    %125 = arith.mulf %119, %124 : vector<32x32xf32>
    %c2 = arith.constant 2 : index
    %c0_67 = arith.constant 0 : index
    %c0_68 = arith.constant 0 : index
    %c0_69 = arith.constant 0 : index
    %126 = vector.load %arg4[%c2, %c0_67, %c0_68, %c0_69] : memref<3x2x96x32xf32, #tpu.memory_space<vmem>>, vector<1x1x96x32xf32>
    %127 = vector.shape_cast %126 : vector<1x1x96x32xf32> to vector<96x32xf32>
    %c2_70 = arith.constant 2 : index
    %c0_71 = arith.constant 0 : index
    %c0_72 = arith.constant 0 : index
    %c0_73 = arith.constant 0 : index
    %128 = vector.load %arg5[%c2_70, %c0_71, %c0_72, %c0_73] : memref<3x2x1x32xf32, #tpu.memory_space<vmem>>, vector<1x1x1x32xf32>
    %129 = vector.shape_cast %128 : vector<1x1x1x32xf32> to vector<1x32xf32>
    %130 = vector.shape_cast %125 : vector<32x32xf32> to vector<2x16x32xf32>
    %cst_74 = arith.constant 0.000000e+00 : f32
    %131 = vector.broadcast %cst_74 : f32 to vector<2x4x32xf32>
    %132 = tpu.concatenate %131, %130, %131 in 1 : vector<2x4x32xf32>, vector<2x16x32xf32>, vector<2x4x32xf32> -> vector<2x24x32xf32>
    %133 = vector.extract_strided_slice %132 {offsets = [0, 0, 0], sizes = [2, 16, 32], strides = [1, 1, 1]} : vector<2x24x32xf32> to vector<2x16x32xf32>
    %134 = vector.extract_strided_slice %132 {offsets = [0, 4, 0], sizes = [2, 16, 32], strides = [1, 1, 1]} : vector<2x24x32xf32> to vector<2x16x32xf32>
    %135 = vector.extract_strided_slice %132 {offsets = [0, 8, 0], sizes = [2, 16, 32], strides = [1, 1, 1]} : vector<2x24x32xf32> to vector<2x16x32xf32>
    %136 = tpu.concatenate %133, %134, %135 in 2 : vector<2x16x32xf32>, vector<2x16x32xf32>, vector<2x16x32xf32> -> vector<2x16x96xf32>
    %137 = vector.shape_cast %136 : vector<2x16x96xf32> to vector<32x96xf32>
    %cst_75 = arith.constant dense<0.000000e+00> : vector<32x32xf32>
    %138 = tpu.matmul %137, %127, %cst_75 {dimension_numbers = #tpu.dot_dimension_numbers<[1], [0], [0], [1], [0, 0, 1, 1], [], []>} : vector<32x96xf32>, vector<96x32xf32>, vector<32x32xf32> -> vector<32x32xf32>
    %139 = vector.broadcast %129 : vector<1x32xf32> to vector<32x32xf32>
    %140 = arith.addf %138, %139 : vector<32x32xf32>
    %cst_76 = arith.constant 5.000000e-01 : f32
    %141 = vector.broadcast %cst_76 : f32 to vector<32x32xf32>
    %142 = arith.mulf %141, %140 : vector<32x32xf32>
    %cst_77 = arith.constant 0.707106769 : f32
    %143 = vector.broadcast %cst_77 : f32 to vector<32x32xf32>
    %144 = arith.mulf %140, %143 : vector<32x32xf32>
    %145 = math.erf %144 : vector<32x32xf32>
    %cst_78 = arith.constant 1.000000e+00 : f32
    %146 = vector.broadcast %cst_78 : f32 to vector<32x32xf32>
    %147 = arith.addf %146, %145 : vector<32x32xf32>
    %148 = arith.mulf %142, %147 : vector<32x32xf32>
    %c2_79 = arith.constant 2 : index
    %c1_80 = arith.constant 1 : index
    %c0_81 = arith.constant 0 : index
    %c0_82 = arith.constant 0 : index
    %149 = vector.load %arg4[%c2_79, %c1_80, %c0_81, %c0_82] : memref<3x2x96x32xf32, #tpu.memory_space<vmem>>, vector<1x1x96x32xf32>
    %150 = vector.shape_cast %149 : vector<1x1x96x32xf32> to vector<96x32xf32>
    %c2_83 = arith.constant 2 : index
    %c1_84 = arith.constant 1 : index
    %c0_85 = arith.constant 0 : index
    %c0_86 = arith.constant 0 : index
    %151 = vector.load %arg5[%c2_83, %c1_84, %c0_85, %c0_86] : memref<3x2x1x32xf32, #tpu.memory_space<vmem>>, vector<1x1x1x32xf32>
    %152 = vector.shape_cast %151 : vector<1x1x1x32xf32> to vector<1x32xf32>
    %153 = vector.shape_cast %148 : vector<32x32xf32> to vector<2x16x32xf32>
    %cst_87 = arith.constant 0.000000e+00 : f32
    %154 = vector.broadcast %cst_87 : f32 to vector<2x4x32xf32>
    %155 = tpu.concatenate %154, %153, %154 in 1 : vector<2x4x32xf32>, vector<2x16x32xf32>, vector<2x4x32xf32> -> vector<2x24x32xf32>
    %156 = vector.extract_strided_slice %155 {offsets = [0, 0, 0], sizes = [2, 16, 32], strides = [1, 1, 1]} : vector<2x24x32xf32> to vector<2x16x32xf32>
    %157 = vector.extract_strided_slice %155 {offsets = [0, 4, 0], sizes = [2, 16, 32], strides = [1, 1, 1]} : vector<2x24x32xf32> to vector<2x16x32xf32>
    %158 = vector.extract_strided_slice %155 {offsets = [0, 8, 0], sizes = [2, 16, 32], strides = [1, 1, 1]} : vector<2x24x32xf32> to vector<2x16x32xf32>
    %159 = tpu.concatenate %156, %157, %158 in 2 : vector<2x16x32xf32>, vector<2x16x32xf32>, vector<2x16x32xf32> -> vector<2x16x96xf32>
    %160 = vector.shape_cast %159 : vector<2x16x96xf32> to vector<32x96xf32>
    %cst_88 = arith.constant dense<0.000000e+00> : vector<32x32xf32>
    %161 = tpu.matmul %160, %150, %cst_88 {dimension_numbers = #tpu.dot_dimension_numbers<[1], [0], [0], [1], [0, 0, 1, 1], [], []>} : vector<32x96xf32>, vector<96x32xf32>, vector<32x32xf32> -> vector<32x32xf32>
    %162 = vector.broadcast %152 : vector<1x32xf32> to vector<32x32xf32>
    %163 = arith.addf %161, %162 : vector<32x32xf32>
    %164 = arith.addf %163, %117 : vector<32x32xf32>
    %c0_89 = arith.constant 0 : index
    %c0_90 = arith.constant 0 : index
    %165 = vector.load %arg10[%c0_89, %c0_90] : memref<32x16xf32, #tpu.memory_space<vmem>>, vector<32x16xf32>
    %cst_91 = arith.constant dense<0.000000e+00> : vector<32x16xf32>
    %166 = tpu.matmul %164, %165, %cst_91 {dimension_numbers = #tpu.dot_dimension_numbers<[1], [0], [0], [1], [0, 0, 1, 1], [], []>} : vector<32x32xf32>, vector<32x16xf32>, vector<32x16xf32> -> vector<32x16xf32>
    %c0_92 = arith.constant 0 : index
    %c0_93 = arith.constant 0 : index
    %167 = vector.load %arg11[%c0_92, %c0_93] : memref<1x16xf32, #tpu.memory_space<vmem>>, vector<1x16xf32>
    %168 = vector.broadcast %167 : vector<1x16xf32> to vector<32x16xf32>
    %169 = arith.addf %166, %168 : vector<32x16xf32>
    %cst_94 = arith.constant 5.000000e-01 : f32
    %170 = vector.broadcast %cst_94 : f32 to vector<32x32xf32>
    %171 = arith.mulf %170, %164 : vector<32x32xf32>
    %cst_95 = arith.constant 0.707106769 : f32
    %172 = vector.broadcast %cst_95 : f32 to vector<32x32xf32>
    %173 = arith.mulf %164, %172 : vector<32x32xf32>
    %174 = math.erf %173 : vector<32x32xf32>
    %cst_96 = arith.constant 1.000000e+00 : f32
    %175 = vector.broadcast %cst_96 : f32 to vector<32x32xf32>
    %176 = arith.addf %175, %174 : vector<32x32xf32>
    %177 = arith.mulf %171, %176 : vector<32x32xf32>
    %c0_97 = arith.constant 0 : index
    %c0_98 = arith.constant 0 : index
    %178 = vector.load %arg6[%c0_97, %c0_98] : memref<96x16xf32, #tpu.memory_space<vmem>>, vector<96x16xf32>
    %c0_99 = arith.constant 0 : index
    %c0_100 = arith.constant 0 : index
    %179 = vector.load %arg7[%c0_99, %c0_100] : memref<1x16xf32, #tpu.memory_space<vmem>>, vector<1x16xf32>
    %180 = vector.shape_cast %177 : vector<32x32xf32> to vector<2x16x32xf32>
    %cst_101 = arith.constant 0.000000e+00 : f32
    %181 = vector.broadcast %cst_101 : f32 to vector<2x8x32xf32>
    %182 = tpu.concatenate %181, %180, %181 in 1 : vector<2x8x32xf32>, vector<2x16x32xf32>, vector<2x8x32xf32> -> vector<2x32x32xf32>
    %183 = vector.extract_strided_slice %182 {offsets = [0, 0, 0], sizes = [2, 16, 32], strides = [1, 1, 1]} : vector<2x32x32xf32> to vector<2x16x32xf32>
    %184 = vector.extract_strided_slice %182 {offsets = [0, 8, 0], sizes = [2, 16, 32], strides = [1, 1, 1]} : vector<2x32x32xf32> to vector<2x16x32xf32>
    %185 = vector.extract_strided_slice %182 {offsets = [0, 16, 0], sizes = [2, 16, 32], strides = [1, 1, 1]} : vector<2x32x32xf32> to vector<2x16x32xf32>
    %186 = tpu.concatenate %183, %184, %185 in 2 : vector<2x16x32xf32>, vector<2x16x32xf32>, vector<2x16x32xf32> -> vector<2x16x96xf32>
    %187 = vector.shape_cast %186 : vector<2x16x96xf32> to vector<32x96xf32>
    %cst_102 = arith.constant dense<0.000000e+00> : vector<32x16xf32>
    %188 = tpu.matmul %187, %178, %cst_102 {dimension_numbers = #tpu.dot_dimension_numbers<[1], [0], [0], [1], [0, 0, 1, 1], [], []>} : vector<32x96xf32>, vector<96x16xf32>, vector<32x16xf32> -> vector<32x16xf32>
    %189 = vector.broadcast %179 : vector<1x16xf32> to vector<32x16xf32>
    %190 = arith.addf %188, %189 : vector<32x16xf32>
    %cst_103 = arith.constant 5.000000e-01 : f32
    %191 = vector.broadcast %cst_103 : f32 to vector<32x16xf32>
    %192 = arith.mulf %191, %190 : vector<32x16xf32>
    %cst_104 = arith.constant 0.707106769 : f32
    %193 = vector.broadcast %cst_104 : f32 to vector<32x16xf32>
    %194 = arith.mulf %190, %193 : vector<32x16xf32>
    %195 = math.erf %194 : vector<32x16xf32>
    %cst_105 = arith.constant 1.000000e+00 : f32
    %196 = vector.broadcast %cst_105 : f32 to vector<32x16xf32>
    %197 = arith.addf %196, %195 : vector<32x16xf32>
    %198 = arith.mulf %192, %197 : vector<32x16xf32>
    %c0_106 = arith.constant 0 : index
    %c0_107 = arith.constant 0 : index
    %199 = vector.load %arg8[%c0_106, %c0_107] : memref<48x16xf32, #tpu.memory_space<vmem>>, vector<48x16xf32>
    %c0_108 = arith.constant 0 : index
    %c0_109 = arith.constant 0 : index
    %200 = vector.load %arg9[%c0_108, %c0_109] : memref<1x16xf32, #tpu.memory_space<vmem>>, vector<1x16xf32>
    %201 = vector.shape_cast %198 : vector<32x16xf32> to vector<2x16x16xf32>
    %cst_110 = arith.constant 0.000000e+00 : f32
    %202 = vector.broadcast %cst_110 : f32 to vector<2x8x16xf32>
    %203 = tpu.concatenate %202, %201, %202 in 1 : vector<2x8x16xf32>, vector<2x16x16xf32>, vector<2x8x16xf32> -> vector<2x32x16xf32>
    %204 = vector.extract_strided_slice %203 {offsets = [0, 0, 0], sizes = [2, 16, 16], strides = [1, 1, 1]} : vector<2x32x16xf32> to vector<2x16x16xf32>
    %205 = vector.extract_strided_slice %203 {offsets = [0, 8, 0], sizes = [2, 16, 16], strides = [1, 1, 1]} : vector<2x32x16xf32> to vector<2x16x16xf32>
    %206 = vector.extract_strided_slice %203 {offsets = [0, 16, 0], sizes = [2, 16, 16], strides = [1, 1, 1]} : vector<2x32x16xf32> to vector<2x16x16xf32>
    %207 = tpu.concatenate %204, %205, %206 in 2 : vector<2x16x16xf32>, vector<2x16x16xf32>, vector<2x16x16xf32> -> vector<2x16x48xf32>
    %208 = vector.shape_cast %207 : vector<2x16x48xf32> to vector<32x48xf32>
    %cst_111 = arith.constant dense<0.000000e+00> : vector<32x16xf32>
    %209 = tpu.matmul %208, %199, %cst_111 {dimension_numbers = #tpu.dot_dimension_numbers<[1], [0], [0], [1], [0, 0, 1, 1], [], []>} : vector<32x48xf32>, vector<48x16xf32>, vector<32x16xf32> -> vector<32x16xf32>
    %210 = vector.broadcast %200 : vector<1x16xf32> to vector<32x16xf32>
    %211 = arith.addf %209, %210 : vector<32x16xf32>
    %212 = arith.addf %211, %169 : vector<32x16xf32>
    %213 = vector.shape_cast %212 : vector<32x16xf32> to vector<2x16x16xf32>
    %c0_112 = arith.constant 0 : index
    %c0_113 = arith.constant 0 : index
    %c0_114 = arith.constant 0 : index
    %214 = vector.load %arg12[%c0_112, %c0_113, %c0_114] : memref<2x16x16xf32, #tpu.memory_space<vmem>>, vector<2x16x16xf32>
    tpu.vector_store %arg12[%c0_112, %c0_113, %c0_114], %213 {strides = array<i32>} : memref<2x16x16xf32, #tpu.memory_space<vmem>>, vector<2x16x16xf32>,
    return
  }
  func.func @transform_0(%arg0: i32) -> (i32, i32, i32) {
    %c0_i32 = arith.constant 0 : i32
    %c0_i32_0 = arith.constant 0 : i32
    %c0_i32_1 = arith.constant 0 : i32
    return %arg0, %c0_i32, %c0_i32_0 : i32, i32, i32
  }
  func.func @transform_1(%arg0: i32) -> (i32, i32) {
    %c0_i32 = arith.constant 0 : i32
    %c0_i32_0 = arith.constant 0 : i32
    %c0_i32_1 = arith.constant 0 : i32
    return %c0_i32, %c0_i32_0 : i32, i32
  }
  func.func @transform_2(%arg0: i32) -> (i32, i32) {
    %c0_i32 = arith.constant 0 : i32
    %c0_i32_0 = arith.constant 0 : i32
    %c0_i32_1 = arith.constant 0 : i32
    return %c0_i32, %c0_i32_0 : i32, i32
  }
  func.func @transform_3(%arg0: i32) -> (i32, i32, i32, i32) {
    %c0_i32 = arith.constant 0 : i32
    %c0_i32_0 = arith.constant 0 : i32
    %c0_i32_1 = arith.constant 0 : i32
    %c0_i32_2 = arith.constant 0 : i32
    %c0_i32_3 = arith.constant 0 : i32
    return %c0_i32, %c0_i32_0, %c0_i32_1, %c0_i32_2 : i32, i32, i32, i32
  }
  func.func @transform_4(%arg0: i32) -> (i32, i32, i32, i32) {
    %c0_i32 = arith.constant 0 : i32
    %c0_i32_0 = arith.constant 0 : i32
    %c0_i32_1 = arith.constant 0 : i32
    %c0_i32_2 = arith.constant 0 : i32
    %c0_i32_3 = arith.constant 0 : i32
    return %c0_i32, %c0_i32_0, %c0_i32_1, %c0_i32_2 : i32, i32, i32, i32
  }
  func.func @transform_5(%arg0: i32) -> (i32, i32) {
    %c0_i32 = arith.constant 0 : i32
    %c0_i32_0 = arith.constant 0 : i32
    %c0_i32_1 = arith.constant 0 : i32
    return %c0_i32, %c0_i32_0 : i32, i32
  }
  func.func @transform_6(%arg0: i32) -> (i32, i32) {
    %c0_i32 = arith.constant 0 : i32
    %c0_i32_0 = arith.constant 0 : i32
    %c0_i32_1 = arith.constant 0 : i32
    return %c0_i32, %c0_i32_0 : i32, i32
  }
  func.func @transform_7(%arg0: i32) -> (i32, i32) {
    %c0_i32 = arith.constant 0 : i32
    %c0_i32_0 = arith.constant 0 : i32
    %c0_i32_1 = arith.constant 0 : i32
    return %c0_i32, %c0_i32_0 : i32, i32
  }
  func.func @transform_8(%arg0: i32) -> (i32, i32) {
    %c0_i32 = arith.constant 0 : i32
    %c0_i32_0 = arith.constant 0 : i32
    %c0_i32_1 = arith.constant 0 : i32
    return %c0_i32, %c0_i32_0 : i32, i32
  }
  func.func @transform_9(%arg0: i32) -> (i32, i32) {
    %c0_i32 = arith.constant 0 : i32
    %c0_i32_0 = arith.constant 0 : i32
    %c0_i32_1 = arith.constant 0 : i32
    return %c0_i32, %c0_i32_0 : i32, i32
  }
  func.func @transform_10(%arg0: i32) -> (i32, i32) {
    %c0_i32 = arith.constant 0 : i32
    %c0_i32_0 = arith.constant 0 : i32
    %c0_i32_1 = arith.constant 0 : i32
    return %c0_i32, %c0_i32_0 : i32, i32
  }
  func.func @transform_11(%arg0: i32) -> (i32, i32, i32) {
    %c0_i32 = arith.constant 0 : i32
    %c0_i32_0 = arith.constant 0 : i32
    %c0_i32_1 = arith.constant 0 : i32
    return %arg0, %c0_i32, %c0_i32_0 : i32, i32, i32
  }
}

</mosaic_0001>

<llo_original>
// kernel: tpu_custom_call.1
$region0: #{tpu_custom_call.1}
  #allocation0 [shape = 'u32[]', space=smem, size = 0x4, offset = 0x4, fixed_abs, tag = 'smem constant byte address 0x4 - core index']
  #allocation1 [shape = 'u32[144,128]{1,0:T(1,128)}', space=vmem, size = 0x12000, scoped, tag = 'internal scratch']
  %s0 = inlined_call_operand.vmem [shape: f32[2,16,8], index: 0, kind: input, shape index: {}]
  %s1 = inlined_call_operand.vmem [shape: f32[8,32], index: 1, kind: input, shape index: {}]
  %s2 = inlined_call_operand.vmem [shape: f32[1,32], index: 2, kind: input, shape index: {}]
  %s3 = inlined_call_operand.vmem [shape: f32[3,2,96,32], index: 3, kind: input, shape index: {}]
  %s4 = inlined_call_operand.vmem [shape: f32[3,2,1,32], index: 4, kind: input, shape index: {}]
  %s5 = inlined_call_operand.vmem [shape: f32[96,16], index: 5, kind: input, shape index: {}]
  %s6 = inlined_call_operand.vmem [shape: f32[1,16], index: 6, kind: input, shape index: {}]
  %s7 = inlined_call_operand.vmem [shape: f32[48,16], index: 7, kind: input, shape index: {}]
  %s8 = inlined_call_operand.vmem [shape: f32[1,16], index: 8, kind: input, shape index: {}]
  %s9 = inlined_call_operand.vmem [shape: f32[32,16], index: 9, kind: input, shape index: {}]
  %s10 = inlined_call_operand.vmem [shape: f32[1,16], index: 10, kind: input, shape index: {}]
  %s11 = inlined_call_operand.hbm [shape: f32[2,16,16], index: 11, kind: output, shape index: {}]
  %s12 = sld [smem:[#allocation0]]
  $region54: #{tpu_custom_call.1} parent=0
    _
  %s14 = ssub.s32 1, %s12
  %s15 = scalar_select 0, %s14, %s12
  $region1: #{tpu_custom_call.1} parent=0
    #allocation2 [shape = 'u8[16384]{0}', space=vmem, size = 0x4000, scoped, tag = 'output window, operand 0, single buffered']
    #allocation3 [shape = 's32[1]{0}', space=sflag, size = 0x4, scoped, tag = 'scoped memory for tpu_custom_call.1']
    %16 = vsyncpa [#allocation3], 0
    // Predicated region
    $region2: #{tpu_custom_call.1} parent=1 // pred_check
      _
    $region3: #{tpu_custom_call.1} parent=1 // pred_check_branch
      %18 = sbr.rel (0) target = $region5
    $region4: #{tpu_custom_call.1} parent=1 // pred_region
      _
    $region5: #{tpu_custom_call.1} parent=1 // pred_fallthru
      _
    // Predicated region
    $region6: #{tpu_custom_call.1} parent=1 // pred_check
      _
    $region7: #{tpu_custom_call.1} parent=1 // pred_check_branch
      %20 = sbr.rel (0) target = $region9
    $region8: #{tpu_custom_call.1} parent=1 // pred_region
      _
    $region9: #{tpu_custom_call.1} parent=1 // pred_fallthru
      _
    // Predicated region
    $region10: #{tpu_custom_call.1} parent=1 // pred_check
      _
    $region11: #{tpu_custom_call.1} parent=1 // pred_check_branch
      %22 = sbr.rel (0) target = $region13
    $region12: #{tpu_custom_call.1} parent=1 // pred_region
      _
    $region13: #{tpu_custom_call.1} parent=1 // pred_fallthru
      _
    // Predicated region
    $region14: #{tpu_custom_call.1} parent=1 // pred_check
      _
    $region15: #{tpu_custom_call.1} parent=1 // pred_check_branch
      %24 = sbr.rel (0) target = $region17
    $region16: #{tpu_custom_call.1} parent=1 // pred_region
      _
    $region17: #{tpu_custom_call.1} parent=1 // pred_fallthru
      _
    // Predicated region
    $region18: #{tpu_custom_call.1} parent=1 // pred_check
      _
    $region19: #{tpu_custom_call.1} parent=1 // pred_check_branch
      %26 = sbr.rel (0) target = $region21
    $region20: #{tpu_custom_call.1} parent=1 // pred_region
      _
    $region21: #{tpu_custom_call.1} parent=1 // pred_fallthru
      _
    // Predicated region
    $region22: #{tpu_custom_call.1} parent=1 // pred_check
      _
    $region23: #{tpu_custom_call.1} parent=1 // pred_check_branch
      %28 = sbr.rel (0) target = $region25
    $region24: #{tpu_custom_call.1} parent=1 // pred_region
      _
    $region25: #{tpu_custom_call.1} parent=1 // pred_fallthru
      _
    // Predicated region
    $region26: #{tpu_custom_call.1} parent=1 // pred_check
      _
    $region27: #{tpu_custom_call.1} parent=1 // pred_check_branch
      %30 = sbr.rel (0) target = $region29
    $region28: #{tpu_custom_call.1} parent=1 // pred_region
      _
    $region29: #{tpu_custom_call.1} parent=1 // pred_fallthru
      _
    // Predicated region
    $region30: #{tpu_custom_call.1} parent=1 // pred_check
      _
    $region31: #{tpu_custom_call.1} parent=1 // pred_check_branch
      %32 = sbr.rel (0) target = $region33
    $region32: #{tpu_custom_call.1} parent=1 // pred_region
      _
    $region33: #{tpu_custom_call.1} parent=1 // pred_fallthru
      _
    // Predicated region
    $region34: #{tpu_custom_call.1} parent=1 // pred_check
      _
    $region35: #{tpu_custom_call.1} parent=1 // pred_check_branch
      %34 = sbr.rel (0) target = $region37
    $region36: #{tpu_custom_call.1} parent=1 // pred_region
      _
    $region37: #{tpu_custom_call.1} parent=1 // pred_fallthru
      _
    // Predicated region
    $region38: #{tpu_custom_call.1} parent=1 // pred_check
      _
    $region39: #{tpu_custom_call.1} parent=1 // pred_check_branch
      %36 = sbr.rel (0) target = $region41
    $region40: #{tpu_custom_call.1} parent=1 // pred_region
      _
    $region41: #{tpu_custom_call.1} parent=1 // pred_fallthru
      _
    // Predicated region
    $region42: #{tpu_custom_call.1} parent=1 // pred_check
      _
    $region43: #{tpu_custom_call.1} parent=1 // pred_check_branch
      %38 = sbr.rel (0) target = $region45
    $region44: #{tpu_custom_call.1} parent=1 // pred_region
      _
    $region45: #{tpu_custom_call.1} parent=1 // pred_fallthru
      _
    %v39 = vld [vmem:[%s0] sm:$0xff]
    %v40 = vld [vmem:[%s0 + $0x8] sm:$0xff]
    %v41 = vld [vmem:[%s0 + $0x10] sm:$0xff]
    %v42 = vld [vmem:[%s0 + $0x18] sm:$0xff]
    %vm43 = vcmp.ne.f32.partialorder %v39, %v39
    %vm44 = vcmp.ne.f32.partialorder %v40, %v40
    %vm45 = vcmp.ne.f32.partialorder %v41, %v41
    %vm46 = vcmp.ne.f32.partialorder %v42, %v42
    %v47 = vsel %vm43, 1.0, 0.0
    %v48 = vsel %vm44, 1.0, 0.0
    %v49 = vsel %vm45, 1.0, 0.0
    %v50 = vsel %vm46, 1.0, 0.0
    %vm51 = vcmask 64512
    %v52 = vsel %vm51, %v47, -inf
    %53 = vmax.xlane.f32.xlu0 %v52
    %v54 = vpop.xlane.xlu0 %53
    %v55 = vsel %vm51, %v48, -inf
    %56 = vmax.xlane.f32.xlu0 %v55
    %v57 = vpop.xlane.xlu0 %56
    %v58 = vsel %vm51, %v49, -inf
    %59 = vmax.xlane.f32.xlu0 %v58
    %v60 = vpop.xlane.xlu0 %59
    %v61 = vsel %vm51, %v50, -inf
    %62 = vmax.xlane.f32.xlu0 %v61
    %v63 = vpop.xlane.xlu0 %62
    %vm64 = vcmp.gt.f32.partialorder %v54, 0.0
    %vm65 = vcmp.gt.f32.partialorder %v57, 0.0
    %vm66 = vcmp.gt.f32.partialorder %v60, 0.0
    %vm67 = vcmp.gt.f32.partialorder %v63, 0.0
    %vm68 = vmxor %vm64, 1
    %vm69 = vmxor %vm65, 1
    %vm70 = vmxor %vm66, 1
    %vm71 = vmxor %vm67, 1
    %v72 = vsel %vm68, 1, 0
    %v73 = vsel %vm69, 1, 0
    %v74 = vsel %vm70, 1, 0
    %v75 = vsel %vm71, 1, 0
    %vm76 = vcmp.eq.s32.totalorder %v72, 1
    %vm77 = vcmp.eq.s32.totalorder %v73, 1
    %vm78 = vcmp.eq.s32.totalorder %v74, 1
    %vm79 = vcmp.eq.s32.totalorder %v75, 1
    %v80 = vsel %vm76, %v39, 0.0
    %v81 = vsel %vm77, %v40, 0.0
    %v82 = vsel %vm78, %v41, 0.0
    %v83 = vsel %vm79, %v42, 0.0
    %v84 = vld [vmem:[%s1] sm:$0xff]
    %v85 = vld [vmem:[%s2] sm:$0x1]
    %v87 = vlaneseq
    %v88 = vshrl.u32 %v87, 7
    %v89 = vsub.s32 0, %v88
    %v90 = vrot.slane %v85, %v89
    %v93 = vsel %vm51, %v80, 0
    %v96 = vsel %vm51, %v81, 0
    %v99 = vsel %vm51, %v82, 0
    %v102 = vsel %vm51, %v83, 0
    %104 = vmatprep.subr.mxu0 0.0
    %105 = vmatpush1.msra.mxu0 0.0
    %106 = vmatprep.subr.mxu0 0.0
    %107 = vmatpush1.msra.mxu0 0.0
    %108 = vmatprep.subr.mxu0 0.0
    %109 = vmatpush1.msra.mxu0 0.0
    %110 = vmatprep.subr.mxu0 0.0
    %111 = vmatpush1.msra.mxu0 0.0
    %112 = vmatprep.subr.mxu0 0.0
    %113 = vmatpush1.msra.mxu0 0.0
    %114 = vmatprep.subr.mxu0 0.0
    %115 = vmatpush1.msra.mxu0 0.0
    %116 = vmatprep.subr.mxu0 0.0
    %117 = vmatpush1.msra.mxu0 0.0
    %118 = vmatprep.subr.mxu0 0.0
    %119 = vmatpush1.msra.mxu0 0.0
    %120 = vmatprep.subr.mxu0 0.0
    %121 = vmatpush1.msra.mxu0 0.0
    %122 = vmatprep.subr.mxu0 0.0
    %123 = vmatpush1.msra.mxu0 0.0
    %124 = vmatprep.subr.mxu0 0.0
    %125 = vmatpush1.msra.mxu0 0.0
    %126 = vmatprep.subr.mxu0 0.0
    %127 = vmatpush1.msra.mxu0 0.0
    %128 = vmatprep.subr.mxu0 0.0
    %129 = vmatpush1.msra.mxu0 0.0
    %130 = vmatprep.subr.mxu0 0.0
    %131 = vmatpush1.msra.mxu0 0.0
    %132 = vmatprep.subr.mxu0 0.0
    %133 = vmatpush1.msra.mxu0 0.0
    %134 = vmatprep.subr.mxu0 0.0
    %135 = vmatpush1.msra.mxu0 %v84
    %136 = vmatprep.subr.mxu0 0.0
    %137 = vmatpush2.msra.mxu0 0.0
    %138 = vmatprep.subr.mxu0 0.0
    %139 = vmatpush2.msra.mxu0 0.0
    %140 = vmatprep.subr.mxu0 0.0
    %141 = vmatpush2.msra.mxu0 0.0
    %142 = vmatprep.subr.mxu0 0.0
    %143 = vmatpush2.msra.mxu0 0.0
    %144 = vmatprep.subr.mxu0 0.0
    %145 = vmatpush2.msra.mxu0 0.0
    %146 = vmatprep.subr.mxu0 0.0
    %147 = vmatpush2.msra.mxu0 0.0
    %148 = vmatprep.subr.mxu0 0.0
    %149 = vmatpush2.msra.mxu0 0.0
    %150 = vmatprep.subr.mxu0 0.0
    %151 = vmatpush2.msra.mxu0 0.0
    %152 = vmatprep.subr.mxu0 0.0
    %153 = vmatpush2.msra.mxu0 0.0
    %154 = vmatprep.subr.mxu0 0.0
    %155 = vmatpush2.msra.mxu0 0.0
    %156 = vmatprep.subr.mxu0 0.0
    %157 = vmatpush2.msra.mxu0 0.0
    %158 = vmatprep.subr.mxu0 0.0
    %159 = vmatpush2.msra.mxu0 0.0
    %160 = vmatprep.subr.mxu0 0.0
    %161 = vmatpush2.msra.mxu0 0.0
    %162 = vmatprep.subr.mxu0 0.0
    %163 = vmatpush2.msra.mxu0 0.0
    %164 = vmatprep.subr.mxu0 0.0
    %165 = vmatpush2.msra.mxu0 0.0
    %166 = vmatprep.subr.mxu0 0.0
    %167 = vmatpush2.msra.mxu0 0.0
    %168 = vmatprep.mubr.f32.mxu0 0.0
    %169 = vmatmul.mubr.f32.gmra.mxu0 %v93
    %v170 = vpop.f32.mrf.mxu0
    %v171 = vadd.f32 %v90, %v170
    %v172 = vpop.f32.mrf.mxu0
    %173 = vmatprep.mubr.f32.mxu0 0.0
    %174 = vmatmul.mubr.f32.gmra.mxu0 %v96
    %v175 = vpop.f32.mrf.mxu0
    %v176 = vadd.f32 %v90, %v175
    %v177 = vpop.f32.mrf.mxu0
    %178 = vmatprep.mubr.f32.mxu0 0.0
    %179 = vmatmul.mubr.f32.gmra.mxu0 %v99
    %v180 = vpop.f32.mrf.mxu0
    %v181 = vadd.f32 %v90, %v180
    %v182 = vpop.f32.mrf.mxu0
    %183 = vmatprep.mubr.f32.mxu0 0.0
    %184 = vmatmul.mubr.f32.gmra.mxu0 %v102
    %v185 = vpop.f32.mrf.mxu0
    %v186 = vadd.f32 %v90, %v185
    %v187 = vpop.f32.mrf.mxu0
    %188 = vdwg.mxu0
    %v189 = vsel %vm76, %v171, 0.0
    %v190 = vsel %vm77, %v176, 0.0
    %v191 = vsel %vm78, %v181, 0.0
    %v192 = vsel %vm79, %v186, 0.0
    %v193 = vmul.f32 %v189, 0.5
    %v194 = vmul.f32 %v190, 0.5
    %v195 = vmul.f32 %v191, 0.5
    %v196 = vmul.f32 %v192, 0.5
    %v197 = vmul.f32 %v189, 0.70710677
    %v198 = vmul.f32 %v190, 0.70710677
    %v199 = vmul.f32 %v191, 0.70710677
    %v200 = vmul.f32 %v192, 0.70710677
    %v201 = verf.f32.pop %v197
    %v202 = verf.f32.pop %v198
    %v203 = verf.f32.pop %v199
    %v204 = verf.f32.pop %v200
    %v205 = vadd.f32 %v201, 1.0
    %v206 = vadd.f32 %v202, 1.0
    %v207 = vadd.f32 %v203, 1.0
    %v208 = vadd.f32 %v204, 1.0
    %v209 = vmul.f32 %v193, %v205
    %v210 = vmul.f32 %v194, %v206
    %v211 = vmul.f32 %v195, %v207
    %v212 = vmul.f32 %v196, %v208
    %v213 = vld [vmem:[%s3] sm:$0xff]
    %v214 = vld [vmem:[%s3 + $0x8] sm:$0xff]
    %v215 = vld [vmem:[%s3 + $0x10] sm:$0xff]
    %v216 = vld [vmem:[%s3 + $0x18] sm:$0xff]
    %v217 = vld [vmem:[%s3 + $0x20] sm:$0xff]
    %v218 = vld [vmem:[%s3 + $0x28] sm:$0xff]
    %v219 = vld [vmem:[%s3 + $0x30] sm:$0xff]
    %v220 = vld [vmem:[%s3 + $0x38] sm:$0xff]
    %v221 = vld [vmem:[%s3 + $0x40] sm:$0xff]
    %v222 = vld [vmem:[%s3 + $0x48] sm:$0xff]
    %v223 = vld [vmem:[%s3 + $0x50] sm:$0xff]
    %v224 = vld [vmem:[%s3 + $0x58] sm:$0xff]
    %v225 = vld [vmem:[%s4] sm:$0x1]
    %vm230 = vcmask 1040384
    %v231 = vrot.slane %v209, 7
    %v232 = vrot.slane %v210, 7
    %v233 = vsel %vm230, %v231, %v232
    %v234 = vrot.slane %v211, 7
    %v235 = vrot.slane %v212, 7
    %v236 = vsel %vm230, %v234, %v235
    %v243 = vsel %vm230, 0.0, %v231
    %v244 = vsel %vm230, 0.0, %v234
    %v245 = vsel %vm230, %v232, 0.0
    %v246 = vsel %vm230, %v235, 0.0
    %vm251 = vcmask 1046528
    %v252 = vrot.slane %v243, 1
    %v253 = vrot.slane %v233, 1
    %v254 = vsel %vm251, %v252, %v253
    %v255 = vrot.slane %v245, 1
    %v256 = vsel %vm251, %v253, %v255
    %v257 = vrot.slane %v244, 1
    %v258 = vrot.slane %v236, 1
    %v259 = vsel %vm251, %v257, %v258
    %v260 = vrot.slane %v246, 1
    %v261 = vsel %vm251, %v258, %v260
    %262 = vrot.lane.b32.xlu0 %v254, 32
    %v263 = vpop.permute.xlu0 %262
    %264 = vrot.lane.b32.xlu0 %v256, 32
    %v265 = vpop.permute.xlu0 %264
    %266 = vrot.lane.b32.xlu0 %v259, 32
    %v267 = vpop.permute.xlu0 %266
    %268 = vrot.lane.b32.xlu0 %v261, 32
    %v269 = vpop.permute.xlu0 %268
    %vm274 = vcmask 1045504
    %v275 = vrot.slane %v243, 2
    %v276 = vrot.slane %v233, 2
    %v277 = vsel %vm274, %v275, %v276
    %v278 = vrot.slane %v245, 2
    %v279 = vsel %vm274, %v276, %v278
    %v280 = vrot.slane %v244, 2
    %v281 = vrot.slane %v236, 2
    %v282 = vsel %vm274, %v280, %v281
    %v283 = vrot.slane %v246, 2
    %v284 = vsel %vm274, %v281, %v283
    %285 = vrot.lane.b32.xlu0 %v277, 64
    %v286 = vpop.permute.xlu0 %285
    %287 = vrot.lane.b32.xlu0 %v279, 64
    %v288 = vpop.permute.xlu0 %287
    %289 = vrot.lane.b32.xlu0 %v282, 64
    %v290 = vpop.permute.xlu0 %289
    %291 = vrot.lane.b32.xlu0 %v284, 64
    %v292 = vpop.permute.xlu0 %291
    %vm297 = vcmask 261120
    %v298 = vsel %vm297, %v243, %v263
    %v299 = vsel %vm297, %v233, %v265
    %v300 = vsel %vm297, %v244, %v267
    %v301 = vsel %vm297, %v236, %v269
    %vm302 = vcmask 523264
    %v303 = vsel %vm302, %v298, %v286
    %v304 = vsel %vm302, %v299, %v288
    %v305 = vsel %vm302, %v300, %v290
    %v306 = vsel %vm302, %v301, %v292
    %v308 = vlaneseq
    %v309 = vshrl.u32 %v308, 7
    %v310 = vsub.s32 0, %v309
    %v311 = vrot.slane %v225, %v310
    %vm313 = vcmask 785408
    %v315 = vsel %vm313, %v303, 0
    %v318 = vsel %vm313, %v304, 0
    %v321 = vsel %vm313, %v305, 0
    %v324 = vsel %vm313, %v306, 0
    %326 = vmatprep.subr.mxu0 0.0
    %327 = vmatpush1.msra.mxu0 0.0
    %328 = vmatprep.subr.mxu0 0.0
    %329 = vmatpush1.msra.mxu0 0.0
    %330 = vmatprep.subr.mxu0 0.0
    %331 = vmatpush1.msra.mxu0 0.0
    %332 = vmatprep.subr.mxu0 0.0
    %333 = vmatpush1.msra.mxu0 0.0
    %334 = vmatprep.subr.mxu0 0.0
    %335 = vmatpush1.msra.mxu0 %v224
    %336 = vmatprep.subr.mxu0 0.0
    %337 = vmatpush1.msra.mxu0 %v223
    %338 = vmatprep.subr.mxu0 0.0
    %339 = vmatpush1.msra.mxu0 %v222
    %340 = vmatprep.subr.mxu0 0.0
    %341 = vmatpush1.msra.mxu0 %v221
    %342 = vmatprep.subr.mxu0 0.0
    %343 = vmatpush1.msra.mxu0 %v220
    %344 = vmatprep.subr.mxu0 0.0
    %345 = vmatpush1.msra.mxu0 %v219
    %346 = vmatprep.subr.mxu0 0.0
    %347 = vmatpush1.msra.mxu0 %v218
    %348 = vmatprep.subr.mxu0 0.0
    %349 = vmatpush1.msra.mxu0 %v217
    %350 = vmatprep.subr.mxu0 0.0
    %351 = vmatpush1.msra.mxu0 %v216
    %352 = vmatprep.subr.mxu0 0.0
    %353 = vmatpush1.msra.mxu0 %v215
    %354 = vmatprep.subr.mxu0 0.0
    %355 = vmatpush1.msra.mxu0 %v214
    %356 = vmatprep.subr.mxu0 0.0
    %357 = vmatpush1.msra.mxu0 %v213
    %358 = vmatprep.subr.mxu0 0.0
    %359 = vmatpush2.msra.mxu0 0.0
    %360 = vmatprep.subr.mxu0 0.0
    %361 = vmatpush2.msra.mxu0 0.0
    %362 = vmatprep.subr.mxu0 0.0
    %363 = vmatpush2.msra.mxu0 0.0
    %364 = vmatprep.subr.mxu0 0.0
    %365 = vmatpush2.msra.mxu0 0.0
    %366 = vmatprep.subr.mxu0 0.0
    %367 = vmatpush2.msra.mxu0 0.0
    %368 = vmatprep.subr.mxu0 0.0
    %369 = vmatpush2.msra.mxu0 0.0
    %370 = vmatprep.subr.mxu0 0.0
    %371 = vmatpush2.msra.mxu0 0.0
    %372 = vmatprep.subr.mxu0 0.0
    %373 = vmatpush2.msra.mxu0 0.0
    %374 = vmatprep.subr.mxu0 0.0
    %375 = vmatpush2.msra.mxu0 0.0
    %376 = vmatprep.subr.mxu0 0.0
    %377 = vmatpush2.msra.mxu0 0.0
    %378 = vmatprep.subr.mxu0 0.0
    %379 = vmatpush2.msra.mxu0 0.0
    %380 = vmatprep.subr.mxu0 0.0
    %381 = vmatpush2.msra.mxu0 0.0
    %382 = vmatprep.subr.mxu0 0.0
    %383 = vmatpush2.msra.mxu0 0.0
    %384 = vmatprep.subr.mxu0 0.0
    %385 = vmatpush2.msra.mxu0 0.0
    %386 = vmatprep.subr.mxu0 0.0
    %387 = vmatpush2.msra.mxu0 0.0
    %388 = vmatprep.subr.mxu0 0.0
    %389 = vmatpush2.msra.mxu0 0.0
    %390 = vmatprep.mubr.f32.mxu0 0.0
    %391 = vmatmul.mubr.f32.gmra.mxu0 %v315
    %v392 = vpop.f32.mrf.mxu0
    %v393 = vadd.f32 %v311, %v392
    %v394 = vpop.f32.mrf.mxu0
    %395 = vmatprep.mubr.f32.mxu0 0.0
    %396 = vmatmul.mubr.f32.gmra.mxu0 %v318
    %v397 = vpop.f32.mrf.mxu0
    %v398 = vadd.f32 %v311, %v397
    %v399 = vpop.f32.mrf.mxu0
    %400 = vmatprep.mubr.f32.mxu0 0.0
    %401 = vmatmul.mubr.f32.gmra.mxu0 %v321
    %v402 = vpop.f32.mrf.mxu0
    %v403 = vadd.f32 %v311, %v402
    %v404 = vpop.f32.mrf.mxu0
    %405 = vmatprep.mubr.f32.mxu0 0.0
    %406 = vmatmul.mubr.f32.gmra.mxu0 %v324
    %v407 = vpop.f32.mrf.mxu0
    %v408 = vadd.f32 %v311, %v407
    %v409 = vpop.f32.mrf.mxu0
    %410 = vdwg.mxu0
    %v411 = vmul.f32 %v393, 0.5
    %v412 = vmul.f32 %v398, 0.5
    %v413 = vmul.f32 %v403, 0.5
    %v414 = vmul.f32 %v408, 0.5
    %v415 = vmul.f32 %v393, 0.70710677
    %v416 = vmul.f32 %v398, 0.70710677
    %v417 = vmul.f32 %v403, 0.70710677
    %v418 = vmul.f32 %v408, 0.70710677
    %v419 = verf.f32.pop %v415
    %v420 = verf.f32.pop %v416
    %v421 = verf.f32.pop %v417
    %v422 = verf.f32.pop %v418
    %v423 = vadd.f32 %v419, 1.0
    %v424 = vadd.f32 %v420, 1.0
    %v425 = vadd.f32 %v421, 1.0
    %v426 = vadd.f32 %v422, 1.0
    %v427 = vmul.f32 %v411, %v423
    %v428 = vmul.f32 %v412, %v424
    %v429 = vmul.f32 %v413, %v425
    %v430 = vmul.f32 %v414, %v426
    %s431 = scalar_lea.vmem %s3, 96
    %v432 = vld [vmem:[%s431] sm:$0xff]
    %v433 = vld [vmem:[%s431 + $0x8] sm:$0xff]
    %v434 = vld [vmem:[%s431 + $0x10] sm:$0xff]
    %v435 = vld [vmem:[%s431 + $0x18] sm:$0xff]
    %v436 = vld [vmem:[%s431 + $0x20] sm:$0xff]
    %v437 = vld [vmem:[%s431 + $0x28] sm:$0xff]
    %v438 = vld [vmem:[%s431 + $0x30] sm:$0xff]
    %v439 = vld [vmem:[%s431 + $0x38] sm:$0xff]
    %v440 = vld [vmem:[%s431 + $0x40] sm:$0xff]
    %v441 = vld [vmem:[%s431 + $0x48] sm:$0xff]
    %v442 = vld [vmem:[%s431 + $0x50] sm:$0xff]
    %v443 = vld [vmem:[%s431 + $0x58] sm:$0xff]
    %s444 = scalar_lea.vmem %s4, 1
    %v445 = vld [vmem:[%s444] sm:$0x1]
    %v450 = vrot.slane %v427, 7
    %v451 = vrot.slane %v428, 7
    %v452 = vsel %vm230, %v450, %v451
    %v453 = vrot.slane %v429, 7
    %v454 = vrot.slane %v430, 7
    %v455 = vsel %vm230, %v453, %v454
    %v462 = vsel %vm230, 0.0, %v450
    %v463 = vsel %vm230, 0.0, %v453
    %v464 = vsel %vm230, %v451, 0.0
    %v465 = vsel %vm230, %v454, 0.0
    %v470 = vrot.slane %v462, 1
    %v471 = vrot.slane %v452, 1
    %v472 = vsel %vm251, %v470, %v471
    %v473 = vrot.slane %v464, 1
    %v474 = vsel %vm251, %v471, %v473
    %v475 = vrot.slane %v463, 1
    %v476 = vrot.slane %v455, 1
    %v477 = vsel %vm251, %v475, %v476
    %v478 = vrot.slane %v465, 1
    %v479 = vsel %vm251, %v476, %v478
    %480 = vrot.lane.b32.xlu0 %v472, 32
    %v481 = vpop.permute.xlu0 %480
    %482 = vrot.lane.b32.xlu0 %v474, 32
    %v483 = vpop.permute.xlu0 %482
    %484 = vrot.lane.b32.xlu0 %v477, 32
    %v485 = vpop.permute.xlu0 %484
    %486 = vrot.lane.b32.xlu0 %v479, 32
    %v487 = vpop.permute.xlu0 %486
    %v492 = vrot.slane %v462, 2
    %v493 = vrot.slane %v452, 2
    %v494 = vsel %vm274, %v492, %v493
    %v495 = vrot.slane %v464, 2
    %v496 = vsel %vm274, %v493, %v495
    %v497 = vrot.slane %v463, 2
    %v498 = vrot.slane %v455, 2
    %v499 = vsel %vm274, %v497, %v498
    %v500 = vrot.slane %v465, 2
    %v501 = vsel %vm274, %v498, %v500
    %502 = vrot.lane.b32.xlu0 %v494, 64
    %v503 = vpop.permute.xlu0 %502
    %504 = vrot.lane.b32.xlu0 %v496, 64
    %v505 = vpop.permute.xlu0 %504
    %506 = vrot.lane.b32.xlu0 %v499, 64
    %v507 = vpop.permute.xlu0 %506
    %508 = vrot.lane.b32.xlu0 %v501, 64
    %v509 = vpop.permute.xlu0 %508
    %v514 = vsel %vm297, %v462, %v481
    %v515 = vsel %vm297, %v452, %v483
    %v516 = vsel %vm297, %v463, %v485
    %v517 = vsel %vm297, %v455, %v487
    %v518 = vsel %vm302, %v514, %v503
    %v519 = vsel %vm302, %v515, %v505
    %v520 = vsel %vm302, %v516, %v507
    %v521 = vsel %vm302, %v517, %v509
    %v523 = vlaneseq
    %v524 = vshrl.u32 %v523, 7
    %v525 = vsub.s32 0, %v524
    %v526 = vrot.slane %v445, %v525
    %v529 = vsel %vm313, %v518, 0
    %v532 = vsel %vm313, %v519, 0
    %v535 = vsel %vm313, %v520, 0
    %v538 = vsel %vm313, %v521, 0
    %540 = vmatprep.subr.mxu0 0.0
    %541 = vmatpush1.msra.mxu0 0.0
    %542 = vmatprep.subr.mxu0 0.0
    %543 = vmatpush1.msra.mxu0 0.0
    %544 = vmatprep.subr.mxu0 0.0
    %545 = vmatpush1.msra.mxu0 0.0
    %546 = vmatprep.subr.mxu0 0.0
    %547 = vmatpush1.msra.mxu0 0.0
    %548 = vmatprep.subr.mxu0 0.0
    %549 = vmatpush1.msra.mxu0 %v443
    %550 = vmatprep.subr.mxu0 0.0
    %551 = vmatpush1.msra.mxu0 %v442
    %552 = vmatprep.subr.mxu0 0.0
    %553 = vmatpush1.msra.mxu0 %v441
    %554 = vmatprep.subr.mxu0 0.0
    %555 = vmatpush1.msra.mxu0 %v440
    %556 = vmatprep.subr.mxu0 0.0
    %557 = vmatpush1.msra.mxu0 %v439
    %558 = vmatprep.subr.mxu0 0.0
    %559 = vmatpush1.msra.mxu0 %v438
    %560 = vmatprep.subr.mxu0 0.0
    %561 = vmatpush1.msra.mxu0 %v437
    %562 = vmatprep.subr.mxu0 0.0
    %563 = vmatpush1.msra.mxu0 %v436
    %564 = vmatprep.subr.mxu0 0.0
    %565 = vmatpush1.msra.mxu0 %v435
    %566 = vmatprep.subr.mxu0 0.0
    %567 = vmatpush1.msra.mxu0 %v434
    %568 = vmatprep.subr.mxu0 0.0
    %569 = vmatpush1.msra.mxu0 %v433
    %570 = vmatprep.subr.mxu0 0.0
    %571 = vmatpush1.msra.mxu0 %v432
    %572 = vmatprep.subr.mxu0 0.0
    %573 = vmatpush2.msra.mxu0 0.0
    %574 = vmatprep.subr.mxu0 0.0
    %575 = vmatpush2.msra.mxu0 0.0
    %576 = vmatprep.subr.mxu0 0.0
    %577 = vmatpush2.msra.mxu0 0.0
    %578 = vmatprep.subr.mxu0 0.0
    %579 = vmatpush2.msra.mxu0 0.0
    %580 = vmatprep.subr.mxu0 0.0
    %581 = vmatpush2.msra.mxu0 0.0
    %582 = vmatprep.subr.mxu0 0.0
    %583 = vmatpush2.msra.mxu0 0.0
    %584 = vmatprep.subr.mxu0 0.0
    %585 = vmatpush2.msra.mxu0 0.0
    %586 = vmatprep.subr.mxu0 0.0
    %587 = vmatpush2.msra.mxu0 0.0
    %588 = vmatprep.subr.mxu0 0.0
    %589 = vmatpush2.msra.mxu0 0.0
    %590 = vmatprep.subr.mxu0 0.0
    %591 = vmatpush2.msra.mxu0 0.0
    %592 = vmatprep.subr.mxu0 0.0
    %593 = vmatpush2.msra.mxu0 0.0
    %594 = vmatprep.subr.mxu0 0.0
    %595 = vmatpush2.msra.mxu0 0.0
    %596 = vmatprep.subr.mxu0 0.0
    %597 = vmatpush2.msra.mxu0 0.0
    %598 = vmatprep.subr.mxu0 0.0
    %599 = vmatpush2.msra.mxu0 0.0
    %600 = vmatprep.subr.mxu0 0.0
    %601 = vmatpush2.msra.mxu0 0.0
    %602 = vmatprep.subr.mxu0 0.0
    %603 = vmatpush2.msra.mxu0 0.0
    %604 = vmatprep.mubr.f32.mxu0 0.0
    %605 = vmatmul.mubr.f32.gmra.mxu0 %v529
    %v606 = vpop.f32.mrf.mxu0
    %v607 = vadd.f32 %v526, %v606
    %v608 = vpop.f32.mrf.mxu0
    %609 = vmatprep.mubr.f32.mxu0 0.0
    %610 = vmatmul.mubr.f32.gmra.mxu0 %v532
    %v611 = vpop.f32.mrf.mxu0
    %v612 = vadd.f32 %v526, %v611
    %v613 = vpop.f32.mrf.mxu0
    %614 = vmatprep.mubr.f32.mxu0 0.0
    %615 = vmatmul.mubr.f32.gmra.mxu0 %v535
    %v616 = vpop.f32.mrf.mxu0
    %v617 = vadd.f32 %v526, %v616
    %v618 = vpop.f32.mrf.mxu0
    %619 = vmatprep.mubr.f32.mxu0 0.0
    %620 = vmatmul.mubr.f32.gmra.mxu0 %v538
    %v621 = vpop.f32.mrf.mxu0
    %v622 = vadd.f32 %v526, %v621
    %v623 = vpop.f32.mrf.mxu0
    %624 = vdwg.mxu0
    %v625 = vadd.f32 %v607, %v189
    %v626 = vadd.f32 %v612, %v190
    %v627 = vadd.f32 %v617, %v191
    %v628 = vadd.f32 %v622, %v192
    %v629 = vmul.f32 %v625, 0.5
    %v630 = vmul.f32 %v626, 0.5
    %v631 = vmul.f32 %v627, 0.5
    %v632 = vmul.f32 %v628, 0.5
    %v633 = vmul.f32 %v625, 0.70710677
    %v634 = vmul.f32 %v626, 0.70710677
    %v635 = vmul.f32 %v627, 0.70710677
    %v636 = vmul.f32 %v628, 0.70710677
    %v637 = verf.f32.pop %v633
    %v638 = verf.f32.pop %v634
    %v639 = verf.f32.pop %v635
    %v640 = verf.f32.pop %v636
    %v641 = vadd.f32 %v637, 1.0
    %v642 = vadd.f32 %v638, 1.0
    %v643 = vadd.f32 %v639, 1.0
    %v644 = vadd.f32 %v640, 1.0
    %v645 = vmul.f32 %v629, %v641
    %v646 = vmul.f32 %v630, %v642
    %v647 = vmul.f32 %v631, %v643
    %v648 = vmul.f32 %v632, %v644
    %s649 = scalar_lea.vmem %s3, 192
    %v650 = vld [vmem:[%s649] sm:$0xff]
    %v651 = vld [vmem:[%s649 + $0x8] sm:$0xff]
    %v652 = vld [vmem:[%s649 + $0x10] sm:$0xff]
    %v653 = vld [vmem:[%s649 + $0x18] sm:$0xff]
    %v654 = vld [vmem:[%s649 + $0x20] sm:$0xff]
    %v655 = vld [vmem:[%s649 + $0x28] sm:$0xff]
    %v656 = vld [vmem:[%s649 + $0x30] sm:$0xff]
    %v657 = vld [vmem:[%s649 + $0x38] sm:$0xff]
    %v658 = vld [vmem:[%s649 + $0x40] sm:$0xff]
    %v659 = vld [vmem:[%s649 + $0x48] sm:$0xff]
    %v660 = vld [vmem:[%s649 + $0x50] sm:$0xff]
    %v661 = vld [vmem:[%s649 + $0x58] sm:$0xff]
    %s662 = scalar_lea.vmem %s4, 2
    %v663 = vld [vmem:[%s662] sm:$0x1]
    %vm668 = vcmask 1041408
    %v669 = vrot.slane %v645, 6
    %v670 = vrot.slane %v646, 6
    %v671 = vsel %vm668, %v669, %v670
    %v672 = vrot.slane %v647, 6
    %v673 = vrot.slane %v648, 6
    %v674 = vsel %vm668, %v672, %v673
    %v681 = vsel %vm668, 0.0, %v669
    %v682 = vsel %vm668, 0.0, %v672
    %v683 = vsel %vm668, %v670, 0.0
    %v684 = vsel %vm668, %v673, 0.0
    %v689 = vrot.slane %v681, 2
    %v690 = vrot.slane %v671, 2
    %v691 = vsel %vm274, %v689, %v690
    %v692 = vrot.slane %v683, 2
    %v693 = vsel %vm274, %v690, %v692
    %v694 = vrot.slane %v682, 2
    %v695 = vrot.slane %v674, 2
    %v696 = vsel %vm274, %v694, %v695
    %v697 = vrot.slane %v684, 2
    %v698 = vsel %vm274, %v695, %v697
    %699 = vrot.lane.b32.xlu0 %v691, 32
    %v700 = vpop.permute.xlu0 %699
    %701 = vrot.lane.b32.xlu0 %v693, 32
    %v702 = vpop.permute.xlu0 %701
    %703 = vrot.lane.b32.xlu0 %v696, 32
    %v704 = vpop.permute.xlu0 %703
    %705 = vrot.lane.b32.xlu0 %v698, 32
    %v706 = vpop.permute.xlu0 %705
    %vm711 = vcmask 1043456
    %v712 = vrot.slane %v681, 4
    %v713 = vrot.slane %v671, 4
    %v714 = vsel %vm711, %v712, %v713
    %v715 = vrot.slane %v683, 4
    %v716 = vsel %vm711, %v713, %v715
    %v717 = vrot.slane %v682, 4
    %v718 = vrot.slane %v674, 4
    %v719 = vsel %vm711, %v717, %v718
    %v720 = vrot.slane %v684, 4
    %v721 = vsel %vm711, %v718, %v720
    %722 = vrot.lane.b32.xlu0 %v714, 64
    %v723 = vpop.permute.xlu0 %722
    %724 = vrot.lane.b32.xlu0 %v716, 64
    %v725 = vpop.permute.xlu0 %724
    %726 = vrot.lane.b32.xlu0 %v719, 64
    %v727 = vpop.permute.xlu0 %726
    %728 = vrot.lane.b32.xlu0 %v721, 64
    %v729 = vpop.permute.xlu0 %728
    %v734 = vsel %vm297, %v681, %v700
    %v735 = vsel %vm297, %v671, %v702
    %v736 = vsel %vm297, %v682, %v704
    %v737 = vsel %vm297, %v674, %v706
    %v738 = vsel %vm302, %v734, %v723
    %v739 = vsel %vm302, %v735, %v725
    %v740 = vsel %vm302, %v736, %v727
    %v741 = vsel %vm302, %v737, %v729
    %v743 = vlaneseq
    %v744 = vshrl.u32 %v743, 7
    %v745 = vsub.s32 0, %v744
    %v746 = vrot.slane %v663, %v745
    %v749 = vsel %vm313, %v738, 0
    %v752 = vsel %vm313, %v739, 0
    %v755 = vsel %vm313, %v740, 0
    %v758 = vsel %vm313, %v741, 0
    %760 = vmatprep.subr.mxu0 0.0
    %761 = vmatpush1.msra.mxu0 0.0
    %762 = vmatprep.subr.mxu0 0.0
    %763 = vmatpush1.msra.mxu0 0.0
    %764 = vmatprep.subr.mxu0 0.0
    %765 = vmatpush1.msra.mxu0 0.0
    %766 = vmatprep.subr.mxu0 0.0
    %767 = vmatpush1.msra.mxu0 0.0
    %768 = vmatprep.subr.mxu0 0.0
    %769 = vmatpush1.msra.mxu0 %v661
    %770 = vmatprep.subr.mxu0 0.0
    %771 = vmatpush1.msra.mxu0 %v660
    %772 = vmatprep.subr.mxu0 0.0
    %773 = vmatpush1.msra.mxu0 %v659
    %774 = vmatprep.subr.mxu0 0.0
    %775 = vmatpush1.msra.mxu0 %v658
    %776 = vmatprep.subr.mxu0 0.0
    %777 = vmatpush1.msra.mxu0 %v657
    %778 = vmatprep.subr.mxu0 0.0
    %779 = vmatpush1.msra.mxu0 %v656
    %780 = vmatprep.subr.mxu0 0.0
    %781 = vmatpush1.msra.mxu0 %v655
    %782 = vmatprep.subr.mxu0 0.0
    %783 = vmatpush1.msra.mxu0 %v654
    %784 = vmatprep.subr.mxu0 0.0
    %785 = vmatpush1.msra.mxu0 %v653
    %786 = vmatprep.subr.mxu0 0.0
    %787 = vmatpush1.msra.mxu0 %v652
    %788 = vmatprep.subr.mxu0 0.0
    %789 = vmatpush1.msra.mxu0 %v651
    %790 = vmatprep.subr.mxu0 0.0
    %791 = vmatpush1.msra.mxu0 %v650
    %792 = vmatprep.subr.mxu0 0.0
    %793 = vmatpush2.msra.mxu0 0.0
    %794 = vmatprep.subr.mxu0 0.0
    %795 = vmatpush2.msra.mxu0 0.0
    %796 = vmatprep.subr.mxu0 0.0
    %797 = vmatpush2.msra.mxu0 0.0
    %798 = vmatprep.subr.mxu0 0.0
    %799 = vmatpush2.msra.mxu0 0.0
    %800 = vmatprep.subr.mxu0 0.0
    %801 = vmatpush2.msra.mxu0 0.0
    %802 = vmatprep.subr.mxu0 0.0
    %803 = vmatpush2.msra.mxu0 0.0
    %804 = vmatprep.subr.mxu0 0.0
    %805 = vmatpush2.msra.mxu0 0.0
    %806 = vmatprep.subr.mxu0 0.0
    %807 = vmatpush2.msra.mxu0 0.0
    %808 = vmatprep.subr.mxu0 0.0
    %809 = vmatpush2.msra.mxu0 0.0
    %810 = vmatprep.subr.mxu0 0.0
    %811 = vmatpush2.msra.mxu0 0.0
    %812 = vmatprep.subr.mxu0 0.0
    %813 = vmatpush2.msra.mxu0 0.0
    %814 = vmatprep.subr.mxu0 0.0
    %815 = vmatpush2.msra.mxu0 0.0
    %816 = vmatprep.subr.mxu0 0.0
    %817 = vmatpush2.msra.mxu0 0.0
    %818 = vmatprep.subr.mxu0 0.0
    %819 = vmatpush2.msra.mxu0 0.0
    %820 = vmatprep.subr.mxu0 0.0
    %821 = vmatpush2.msra.mxu0 0.0
    %822 = vmatprep.subr.mxu0 0.0
    %823 = vmatpush2.msra.mxu0 0.0
    %824 = vmatprep.mubr.f32.mxu0 0.0
    %825 = vmatmul.mubr.f32.gmra.mxu0 %v749
    %v826 = vpop.f32.mrf.mxu0
    %v827 = vadd.f32 %v746, %v826
    %v828 = vpop.f32.mrf.mxu0
    %829 = vmatprep.mubr.f32.mxu0 0.0
    %830 = vmatmul.mubr.f32.gmra.mxu0 %v752
    %v831 = vpop.f32.mrf.mxu0
    %v832 = vadd.f32 %v746, %v831
    %v833 = vpop.f32.mrf.mxu0
    %834 = vmatprep.mubr.f32.mxu0 0.0
    %835 = vmatmul.mubr.f32.gmra.mxu0 %v755
    %v836 = vpop.f32.mrf.mxu0
    %v837 = vadd.f32 %v746, %v836
    %v838 = vpop.f32.mrf.mxu0
    %839 = vmatprep.mubr.f32.mxu0 0.0
    %840 = vmatmul.mubr.f32.gmra.mxu0 %v758
    %v841 = vpop.f32.mrf.mxu0
    %v842 = vadd.f32 %v746, %v841
    %v843 = vpop.f32.mrf.mxu0
    %844 = vdwg.mxu0
    %v845 = vmul.f32 %v827, 0.5
    %v846 = vmul.f32 %v832, 0.5
    %v847 = vmul.f32 %v837, 0.5
    %v848 = vmul.f32 %v842, 0.5
    %v849 = vmul.f32 %v827, 0.70710677
    %v850 = vmul.f32 %v832, 0.70710677
    %v851 = vmul.f32 %v837, 0.70710677
    %v852 = vmul.f32 %v842, 0.70710677
    %v853 = verf.f32.pop %v849
    %v854 = verf.f32.pop %v850
    %v855 = verf.f32.pop %v851
    %v856 = verf.f32.pop %v852
    %v857 = vadd.f32 %v853, 1.0
    %v858 = vadd.f32 %v854, 1.0
    %v859 = vadd.f32 %v855, 1.0
    %v860 = vadd.f32 %v856, 1.0
    %v861 = vmul.f32 %v845, %v857
    %v862 = vmul.f32 %v846, %v858
    %v863 = vmul.f32 %v847, %v859
    %v864 = vmul.f32 %v848, %v860
    %s865 = scalar_lea.vmem %s3, 288
    %v866 = vld [vmem:[%s865] sm:$0xff]
    %v867 = vld [vmem:[%s865 + $0x8] sm:$0xff]
    %v868 = vld [vmem:[%s865 + $0x10] sm:$0xff]
    %v869 = vld [vmem:[%s865 + $0x18] sm:$0xff]
    %v870 = vld [vmem:[%s865 + $0x20] sm:$0xff]
    %v871 = vld [vmem:[%s865 + $0x28] sm:$0xff]
    %v872 = vld [vmem:[%s865 + $0x30] sm:$0xff]
    %v873 = vld [vmem:[%s865 + $0x38] sm:$0xff]
    %v874 = vld [vmem:[%s865 + $0x40] sm:$0xff]
    %v875 = vld [vmem:[%s865 + $0x48] sm:$0xff]
    %v876 = vld [vmem:[%s865 + $0x50] sm:$0xff]
    %v877 = vld [vmem:[%s865 + $0x58] sm:$0xff]
    %s878 = scalar_lea.vmem %s4, 3
    %v879 = vld [vmem:[%s878] sm:$0x1]
    %v884 = vrot.slane %v861, 6
    %v885 = vrot.slane %v862, 6
    %v886 = vsel %vm668, %v884, %v885
    %v887 = vrot.slane %v863, 6
    %v888 = vrot.slane %v864, 6
    %v889 = vsel %vm668, %v887, %v888
    %v896 = vsel %vm668, 0.0, %v884
    %v897 = vsel %vm668, 0.0, %v887
    %v898 = vsel %vm668, %v885, 0.0
    %v899 = vsel %vm668, %v888, 0.0
    %v904 = vrot.slane %v896, 2
    %v905 = vrot.slane %v886, 2
    %v906 = vsel %vm274, %v904, %v905
    %v907 = vrot.slane %v898, 2
    %v908 = vsel %vm274, %v905, %v907
    %v909 = vrot.slane %v897, 2
    %v910 = vrot.slane %v889, 2
    %v911 = vsel %vm274, %v909, %v910
    %v912 = vrot.slane %v899, 2
    %v913 = vsel %vm274, %v910, %v912
    %914 = vrot.lane.b32.xlu0 %v906, 32
    %v915 = vpop.permute.xlu0 %914
    %916 = vrot.lane.b32.xlu0 %v908, 32
    %v917 = vpop.permute.xlu0 %916
    %918 = vrot.lane.b32.xlu0 %v911, 32
    %v919 = vpop.permute.xlu0 %918
    %920 = vrot.lane.b32.xlu0 %v913, 32
    %v921 = vpop.permute.xlu0 %920
    %v926 = vrot.slane %v896, 4
    %v927 = vrot.slane %v886, 4
    %v928 = vsel %vm711, %v926, %v927
    %v929 = vrot.slane %v898, 4
    %v930 = vsel %vm711, %v927, %v929
    %v931 = vrot.slane %v897, 4
    %v932 = vrot.slane %v889, 4
    %v933 = vsel %vm711, %v931, %v932
    %v934 = vrot.slane %v899, 4
    %v935 = vsel %vm711, %v932, %v934
    %936 = vrot.lane.b32.xlu0 %v928, 64
    %v937 = vpop.permute.xlu0 %936
    %938 = vrot.lane.b32.xlu0 %v930, 64
    %v939 = vpop.permute.xlu0 %938
    %940 = vrot.lane.b32.xlu0 %v933, 64
    %v941 = vpop.permute.xlu0 %940
    %942 = vrot.lane.b32.xlu0 %v935, 64
    %v943 = vpop.permute.xlu0 %942
    %v948 = vsel %vm297, %v896, %v915
    %v949 = vsel %vm297, %v886, %v917
    %v950 = vsel %vm297, %v897, %v919
    %v951 = vsel %vm297, %v889, %v921
    %v952 = vsel %vm302, %v948, %v937
    %v953 = vsel %vm302, %v949, %v939
    %v954 = vsel %vm302, %v950, %v941
    %v955 = vsel %vm302, %v951, %v943
    %v957 = vlaneseq
    %v958 = vshrl.u32 %v957, 7
    %v959 = vsub.s32 0, %v958
    %v960 = vrot.slane %v879, %v959
    %v963 = vsel %vm313, %v952, 0
    %v966 = vsel %vm313, %v953, 0
    %v969 = vsel %vm313, %v954, 0
    %v972 = vsel %vm313, %v955, 0
    %974 = vmatprep.subr.mxu0 0.0
    %975 = vmatpush1.msra.mxu0 0.0
    %976 = vmatprep.subr.mxu0 0.0
    %977 = vmatpush1.msra.mxu0 0.0
    %978 = vmatprep.subr.mxu0 0.0
    %979 = vmatpush1.msra.mxu0 0.0
    %980 = vmatprep.subr.mxu0 0.0
    %981 = vmatpush1.msra.mxu0 0.0
    %982 = vmatprep.subr.mxu0 0.0
    %983 = vmatpush1.msra.mxu0 %v877
    %984 = vmatprep.subr.mxu0 0.0
    %985 = vmatpush1.msra.mxu0 %v876
    %986 = vmatprep.subr.mxu0 0.0
    %987 = vmatpush1.msra.mxu0 %v875
    %988 = vmatprep.subr.mxu0 0.0
    %989 = vmatpush1.msra.mxu0 %v874
    %990 = vmatprep.subr.mxu0 0.0
    %991 = vmatpush1.msra.mxu0 %v873
    %992 = vmatprep.subr.mxu0 0.0
    %993 = vmatpush1.msra.mxu0 %v872
    %994 = vmatprep.subr.mxu0 0.0
    %995 = vmatpush1.msra.mxu0 %v871
    %996 = vmatprep.subr.mxu0 0.0
    %997 = vmatpush1.msra.mxu0 %v870
    %998 = vmatprep.subr.mxu0 0.0
    %999 = vmatpush1.msra.mxu0 %v869
    %1000 = vmatprep.subr.mxu0 0.0
    %1001 = vmatpush1.msra.mxu0 %v868
    %1002 = vmatprep.subr.mxu0 0.0
    %1003 = vmatpush1.msra.mxu0 %v867
    %1004 = vmatprep.subr.mxu0 0.0
    %1005 = vmatpush1.msra.mxu0 %v866
    %1006 = vmatprep.subr.mxu0 0.0
    %1007 = vmatpush2.msra.mxu0 0.0
    %1008 = vmatprep.subr.mxu0 0.0
    %1009 = vmatpush2.msra.mxu0 0.0
    %1010 = vmatprep.subr.mxu0 0.0
    %1011 = vmatpush2.msra.mxu0 0.0
    %1012 = vmatprep.subr.mxu0 0.0
    %1013 = vmatpush2.msra.mxu0 0.0
    %1014 = vmatprep.subr.mxu0 0.0
    %1015 = vmatpush2.msra.mxu0 0.0
    %1016 = vmatprep.subr.mxu0 0.0
    %1017 = vmatpush2.msra.mxu0 0.0
    %1018 = vmatprep.subr.mxu0 0.0
    %1019 = vmatpush2.msra.mxu0 0.0
    %1020 = vmatprep.subr.mxu0 0.0
    %1021 = vmatpush2.msra.mxu0 0.0
    %1022 = vmatprep.subr.mxu0 0.0
    %1023 = vmatpush2.msra.mxu0 0.0
    %1024 = vmatprep.subr.mxu0 0.0
    %1025 = vmatpush2.msra.mxu0 0.0
    %1026 = vmatprep.subr.mxu0 0.0
    %1027 = vmatpush2.msra.mxu0 0.0
    %1028 = vmatprep.subr.mxu0 0.0
    %1029 = vmatpush2.msra.mxu0 0.0
    %1030 = vmatprep.subr.mxu0 0.0
    %1031 = vmatpush2.msra.mxu0 0.0
    %1032 = vmatprep.subr.mxu0 0.0
    %1033 = vmatpush2.msra.mxu0 0.0
    %1034 = vmatprep.subr.mxu0 0.0
    %1035 = vmatpush2.msra.mxu0 0.0
    %1036 = vmatprep.subr.mxu0 0.0
    %1037 = vmatpush2.msra.mxu0 0.0
    %1038 = vmatprep.mubr.f32.mxu0 0.0
    %1039 = vmatmul.mubr.f32.gmra.mxu0 %v963
    %v1040 = vpop.f32.mrf.mxu0
    %v1041 = vadd.f32 %v960, %v1040
    %v1042 = vpop.f32.mrf.mxu0
    %1043 = vmatprep.mubr.f32.mxu0 0.0
    %1044 = vmatmul.mubr.f32.gmra.mxu0 %v966
    %v1045 = vpop.f32.mrf.mxu0
    %v1046 = vadd.f32 %v960, %v1045
    %v1047 = vpop.f32.mrf.mxu0
    %1048 = vmatprep.mubr.f32.mxu0 0.0
    %1049 = vmatmul.mubr.f32.gmra.mxu0 %v969
    %v1050 = vpop.f32.mrf.mxu0
    %v1051 = vadd.f32 %v960, %v1050
    %v1052 = vpop.f32.mrf.mxu0
    %1053 = vmatprep.mubr.f32.mxu0 0.0
    %1054 = vmatmul.mubr.f32.gmra.mxu0 %v972
    %v1055 = vpop.f32.mrf.mxu0
    %v1056 = vadd.f32 %v960, %v1055
    %v1057 = vpop.f32.mrf.mxu0
    %1058 = vdwg.mxu0
    %v1059 = vadd.f32 %v1041, %v625
    %v1060 = vadd.f32 %v1046, %v626
    %v1061 = vadd.f32 %v1051, %v627
    %v1062 = vadd.f32 %v1056, %v628
    %v1063 = vmul.f32 %v1059, 0.5
    %v1064 = vmul.f32 %v1060, 0.5
    %v1065 = vmul.f32 %v1061, 0.5
    %v1066 = vmul.f32 %v1062, 0.5
    %v1067 = vmul.f32 %v1059, 0.70710677
    %v1068 = vmul.f32 %v1060, 0.70710677
    %v1069 = vmul.f32 %v1061, 0.70710677
    %v1070 = vmul.f32 %v1062, 0.70710677
    %v1071 = verf.f32.pop %v1067
    %v1072 = verf.f32.pop %v1068
    %v1073 = verf.f32.pop %v1069
    %v1074 = verf.f32.pop %v1070
    %v1075 = vadd.f32 %v1071, 1.0
    %v1076 = vadd.f32 %v1072, 1.0
    %v1077 = vadd.f32 %v1073, 1.0
    %v1078 = vadd.f32 %v1074, 1.0
    %v1079 = vmul.f32 %v1063, %v1075
    %v1080 = vmul.f32 %v1064, %v1076
    %v1081 = vmul.f32 %v1065, %v1077
    %v1082 = vmul.f32 %v1066, %v1078
    %s1083 = scalar_lea.vmem %s3, 384
    %v1084 = vld [vmem:[%s1083] sm:$0xff]
    %v1085 = vld [vmem:[%s1083 + $0x8] sm:$0xff]
    %v1086 = vld [vmem:[%s1083 + $0x10] sm:$0xff]
    %v1087 = vld [vmem:[%s1083 + $0x18] sm:$0xff]
    %v1088 = vld [vmem:[%s1083 + $0x20] sm:$0xff]
    %v1089 = vld [vmem:[%s1083 + $0x28] sm:$0xff]
    %v1090 = vld [vmem:[%s1083 + $0x30] sm:$0xff]
    %v1091 = vld [vmem:[%s1083 + $0x38] sm:$0xff]
    %v1092 = vld [vmem:[%s1083 + $0x40] sm:$0xff]
    %v1093 = vld [vmem:[%s1083 + $0x48] sm:$0xff]
    %v1094 = vld [vmem:[%s1083 + $0x50] sm:$0xff]
    %v1095 = vld [vmem:[%s1083 + $0x58] sm:$0xff]
    %s1096 = scalar_lea.vmem %s4, 4
    %v1097 = vld [vmem:[%s1096] sm:$0x1]
    %v1102 = vrot.slane %v1079, 4
    %v1103 = vrot.slane %v1080, 4
    %v1104 = vsel %vm711, %v1102, %v1103
    %v1105 = vrot.slane %v1081, 4
    %v1106 = vrot.slane %v1082, 4
    %v1107 = vsel %vm711, %v1105, %v1106
    %v1114 = vsel %vm711, 0.0, %v1102
    %v1115 = vsel %vm711, 0.0, %v1105
    %v1116 = vsel %vm711, %v1103, 0.0
    %v1117 = vsel %vm711, %v1106, 0.0
    %v1122 = vrot.slane %v1114, 4
    %v1123 = vrot.slane %v1104, 4
    %v1124 = vsel %vm711, %v1122, %v1123
    %v1125 = vrot.slane %v1116, 4
    %v1126 = vsel %vm711, %v1123, %v1125
    %v1127 = vrot.slane %v1115, 4
    %v1128 = vrot.slane %v1107, 4
    %v1129 = vsel %vm711, %v1127, %v1128
    %v1130 = vrot.slane %v1117, 4
    %v1131 = vsel %vm711, %v1128, %v1130
    %1132 = vrot.lane.b32.xlu0 %v1124, 32
    %v1133 = vpop.permute.xlu0 %1132
    %1134 = vrot.lane.b32.xlu0 %v1126, 32
    %v1135 = vpop.permute.xlu0 %1134
    %1136 = vrot.lane.b32.xlu0 %v1129, 32
    %v1137 = vpop.permute.xlu0 %1136
    %1138 = vrot.lane.b32.xlu0 %v1131, 32
    %v1139 = vpop.permute.xlu0 %1138
    %1144 = vrot.lane.b32.xlu0 %v1104, 64
    %v1145 = vpop.permute.xlu0 %1144
    %1146 = vrot.lane.b32.xlu0 %v1116, 64
    %v1147 = vpop.permute.xlu0 %1146
    %1148 = vrot.lane.b32.xlu0 %v1107, 64
    %v1149 = vpop.permute.xlu0 %1148
    %1150 = vrot.lane.b32.xlu0 %v1117, 64
    %v1151 = vpop.permute.xlu0 %1150
    %v1156 = vsel %vm297, %v1114, %v1133
    %v1157 = vsel %vm297, %v1104, %v1135
    %v1158 = vsel %vm297, %v1115, %v1137
    %v1159 = vsel %vm297, %v1107, %v1139
    %v1160 = vsel %vm302, %v1156, %v1145
    %v1161 = vsel %vm302, %v1157, %v1147
    %v1162 = vsel %vm302, %v1158, %v1149
    %v1163 = vsel %vm302, %v1159, %v1151
    %v1165 = vlaneseq
    %v1166 = vshrl.u32 %v1165, 7
    %v1167 = vsub.s32 0, %v1166
    %v1168 = vrot.slane %v1097, %v1167
    %v1171 = vsel %vm313, %v1160, 0
    %v1174 = vsel %vm313, %v1161, 0
    %v1177 = vsel %vm313, %v1162, 0
    %v1180 = vsel %vm313, %v1163, 0
    %1182 = vmatprep.subr.mxu0 0.0
    %1183 = vmatpush1.msra.mxu0 0.0
    %1184 = vmatprep.subr.mxu0 0.0
    %1185 = vmatpush1.msra.mxu0 0.0
    %1186 = vmatprep.subr.mxu0 0.0
    %1187 = vmatpush1.msra.mxu0 0.0
    %1188 = vmatprep.subr.mxu0 0.0
    %1189 = vmatpush1.msra.mxu0 0.0
    %1190 = vmatprep.subr.mxu0 0.0
    %1191 = vmatpush1.msra.mxu0 %v1095
    %1192 = vmatprep.subr.mxu0 0.0
    %1193 = vmatpush1.msra.mxu0 %v1094
    %1194 = vmatprep.subr.mxu0 0.0
    %1195 = vmatpush1.msra.mxu0 %v1093
    %1196 = vmatprep.subr.mxu0 0.0
    %1197 = vmatpush1.msra.mxu0 %v1092
    %1198 = vmatprep.subr.mxu0 0.0
    %1199 = vmatpush1.msra.mxu0 %v1091
    %1200 = vmatprep.subr.mxu0 0.0
    %1201 = vmatpush1.msra.mxu0 %v1090
    %1202 = vmatprep.subr.mxu0 0.0
    %1203 = vmatpush1.msra.mxu0 %v1089
    %1204 = vmatprep.subr.mxu0 0.0
    %1205 = vmatpush1.msra.mxu0 %v1088
    %1206 = vmatprep.subr.mxu0 0.0
    %1207 = vmatpush1.msra.mxu0 %v1087
    %1208 = vmatprep.subr.mxu0 0.0
    %1209 = vmatpush1.msra.mxu0 %v1086
    %1210 = vmatprep.subr.mxu0 0.0
    %1211 = vmatpush1.msra.mxu0 %v1085
    %1212 = vmatprep.subr.mxu0 0.0
    %1213 = vmatpush1.msra.mxu0 %v1084
    %1214 = vmatprep.subr.mxu0 0.0
    %1215 = vmatpush2.msra.mxu0 0.0
    %1216 = vmatprep.subr.mxu0 0.0
    %1217 = vmatpush2.msra.mxu0 0.0
    %1218 = vmatprep.subr.mxu0 0.0
    %1219 = vmatpush2.msra.mxu0 0.0
    %1220 = vmatprep.subr.mxu0 0.0
    %1221 = vmatpush2.msra.mxu0 0.0
    %1222 = vmatprep.subr.mxu0 0.0
    %1223 = vmatpush2.msra.mxu0 0.0
    %1224 = vmatprep.subr.mxu0 0.0
    %1225 = vmatpush2.msra.mxu0 0.0
    %1226 = vmatprep.subr.mxu0 0.0
    %1227 = vmatpush2.msra.mxu0 0.0
    %1228 = vmatprep.subr.mxu0 0.0
    %1229 = vmatpush2.msra.mxu0 0.0
    %1230 = vmatprep.subr.mxu0 0.0
    %1231 = vmatpush2.msra.mxu0 0.0
    %1232 = vmatprep.subr.mxu0 0.0
    %1233 = vmatpush2.msra.mxu0 0.0
    %1234 = vmatprep.subr.mxu0 0.0
    %1235 = vmatpush2.msra.mxu0 0.0
    %1236 = vmatprep.subr.mxu0 0.0
    %1237 = vmatpush2.msra.mxu0 0.0
    %1238 = vmatprep.subr.mxu0 0.0
    %1239 = vmatpush2.msra.mxu0 0.0
    %1240 = vmatprep.subr.mxu0 0.0
    %1241 = vmatpush2.msra.mxu0 0.0
    %1242 = vmatprep.subr.mxu0 0.0
    %1243 = vmatpush2.msra.mxu0 0.0
    %1244 = vmatprep.subr.mxu0 0.0
    %1245 = vmatpush2.msra.mxu0 0.0
    %1246 = vmatprep.mubr.f32.mxu0 0.0
    %1247 = vmatmul.mubr.f32.gmra.mxu0 %v1171
    %v1248 = vpop.f32.mrf.mxu0
    %v1249 = vadd.f32 %v1168, %v1248
    %v1250 = vpop.f32.mrf.mxu0
    %1251 = vmatprep.mubr.f32.mxu0 0.0
    %1252 = vmatmul.mubr.f32.gmra.mxu0 %v1174
    %v1253 = vpop.f32.mrf.mxu0
    %v1254 = vadd.f32 %v1168, %v1253
    %v1255 = vpop.f32.mrf.mxu0
    %1256 = vmatprep.mubr.f32.mxu0 0.0
    %1257 = vmatmul.mubr.f32.gmra.mxu0 %v1177
    %v1258 = vpop.f32.mrf.mxu0
    %v1259 = vadd.f32 %v1168, %v1258
    %v1260 = vpop.f32.mrf.mxu0
    %1261 = vmatprep.mubr.f32.mxu0 0.0
    %1262 = vmatmul.mubr.f32.gmra.mxu0 %v1180
    %v1263 = vpop.f32.mrf.mxu0
    %v1264 = vadd.f32 %v1168, %v1263
    %v1265 = vpop.f32.mrf.mxu0
    %1266 = vdwg.mxu0
    %v1267 = vmul.f32 %v1249, 0.5
    %v1268 = vmul.f32 %v1254, 0.5
    %v1269 = vmul.f32 %v1259, 0.5
    %v1270 = vmul.f32 %v1264, 0.5
    %v1271 = vmul.f32 %v1249, 0.70710677
    %v1272 = vmul.f32 %v1254, 0.70710677
    %v1273 = vmul.f32 %v1259, 0.70710677
    %v1274 = vmul.f32 %v1264, 0.70710677
    %v1275 = verf.f32.pop %v1271
    %v1276 = verf.f32.pop %v1272
    %v1277 = verf.f32.pop %v1273
    %v1278 = verf.f32.pop %v1274
    %v1279 = vadd.f32 %v1275, 1.0
    %v1280 = vadd.f32 %v1276, 1.0
    %v1281 = vadd.f32 %v1277, 1.0
    %v1282 = vadd.f32 %v1278, 1.0
    %v1283 = vmul.f32 %v1267, %v1279
    %v1284 = vmul.f32 %v1268, %v1280
    %v1285 = vmul.f32 %v1269, %v1281
    %v1286 = vmul.f32 %v1270, %v1282
    %s1287 = scalar_lea.vmem %s3, 480
    %v1288 = vld [vmem:[%s1287] sm:$0xff]
    %v1289 = vld [vmem:[%s1287 + $0x8] sm:$0xff]
    %v1290 = vld [vmem:[%s1287 + $0x10] sm:$0xff]
    %v1291 = vld [vmem:[%s1287 + $0x18] sm:$0xff]
    %v1292 = vld [vmem:[%s1287 + $0x20] sm:$0xff]
    %v1293 = vld [vmem:[%s1287 + $0x28] sm:$0xff]
    %v1294 = vld [vmem:[%s1287 + $0x30] sm:$0xff]
    %v1295 = vld [vmem:[%s1287 + $0x38] sm:$0xff]
    %v1296 = vld [vmem:[%s1287 + $0x40] sm:$0xff]
    %v1297 = vld [vmem:[%s1287 + $0x48] sm:$0xff]
    %v1298 = vld [vmem:[%s1287 + $0x50] sm:$0xff]
    %v1299 = vld [vmem:[%s1287 + $0x58] sm:$0xff]
    %s1300 = scalar_lea.vmem %s4, 5
    %v1301 = vld [vmem:[%s1300] sm:$0x1]
    %v1306 = vrot.slane %v1283, 4
    %v1307 = vrot.slane %v1284, 4
    %v1308 = vsel %vm711, %v1306, %v1307
    %v1309 = vrot.slane %v1285, 4
    %v1310 = vrot.slane %v1286, 4
    %v1311 = vsel %vm711, %v1309, %v1310
    %v1318 = vsel %vm711, 0.0, %v1306
    %v1319 = vsel %vm711, 0.0, %v1309
    %v1320 = vsel %vm711, %v1307, 0.0
    %v1321 = vsel %vm711, %v1310, 0.0
    %v1326 = vrot.slane %v1318, 4
    %v1327 = vrot.slane %v1308, 4
    %v1328 = vsel %vm711, %v1326, %v1327
    %v1329 = vrot.slane %v1320, 4
    %v1330 = vsel %vm711, %v1327, %v1329
    %v1331 = vrot.slane %v1319, 4
    %v1332 = vrot.slane %v1311, 4
    %v1333 = vsel %vm711, %v1331, %v1332
    %v1334 = vrot.slane %v1321, 4
    %v1335 = vsel %vm711, %v1332, %v1334
    %1336 = vrot.lane.b32.xlu0 %v1328, 32
    %v1337 = vpop.permute.xlu0 %1336
    %1338 = vrot.lane.b32.xlu0 %v1330, 32
    %v1339 = vpop.permute.xlu0 %1338
    %1340 = vrot.lane.b32.xlu0 %v1333, 32
    %v1341 = vpop.permute.xlu0 %1340
    %1342 = vrot.lane.b32.xlu0 %v1335, 32
    %v1343 = vpop.permute.xlu0 %1342
    %1348 = vrot.lane.b32.xlu0 %v1308, 64
    %v1349 = vpop.permute.xlu0 %1348
    %1350 = vrot.lane.b32.xlu0 %v1320, 64
    %v1351 = vpop.permute.xlu0 %1350
    %1352 = vrot.lane.b32.xlu0 %v1311, 64
    %v1353 = vpop.permute.xlu0 %1352
    %1354 = vrot.lane.b32.xlu0 %v1321, 64
    %v1355 = vpop.permute.xlu0 %1354
    %v1360 = vsel %vm297, %v1318, %v1337
    %v1361 = vsel %vm297, %v1308, %v1339
    %v1362 = vsel %vm297, %v1319, %v1341
    %v1363 = vsel %vm297, %v1311, %v1343
    %v1364 = vsel %vm302, %v1360, %v1349
    %v1365 = vsel %vm302, %v1361, %v1351
    %v1366 = vsel %vm302, %v1362, %v1353
    %v1367 = vsel %vm302, %v1363, %v1355
    %v1369 = vlaneseq
    %v1370 = vshrl.u32 %v1369, 7
    %v1371 = vsub.s32 0, %v1370
    %v1372 = vrot.slane %v1301, %v1371
    %v1375 = vsel %vm313, %v1364, 0
    %v1378 = vsel %vm313, %v1365, 0
    %v1381 = vsel %vm313, %v1366, 0
    %v1384 = vsel %vm313, %v1367, 0
    %1386 = vmatprep.subr.mxu0 0.0
    %1387 = vmatpush1.msra.mxu0 0.0
    %1388 = vmatprep.subr.mxu0 0.0
    %1389 = vmatpush1.msra.mxu0 0.0
    %1390 = vmatprep.subr.mxu0 0.0
    %1391 = vmatpush1.msra.mxu0 0.0
    %1392 = vmatprep.subr.mxu0 0.0
    %1393 = vmatpush1.msra.mxu0 0.0
    %1394 = vmatprep.subr.mxu0 0.0
    %1395 = vmatpush1.msra.mxu0 %v1299
    %1396 = vmatprep.subr.mxu0 0.0
    %1397 = vmatpush1.msra.mxu0 %v1298
    %1398 = vmatprep.subr.mxu0 0.0
    %1399 = vmatpush1.msra.mxu0 %v1297
    %1400 = vmatprep.subr.mxu0 0.0
    %1401 = vmatpush1.msra.mxu0 %v1296
    %1402 = vmatprep.subr.mxu0 0.0
    %1403 = vmatpush1.msra.mxu0 %v1295
    %1404 = vmatprep.subr.mxu0 0.0
    %1405 = vmatpush1.msra.mxu0 %v1294
    %1406 = vmatprep.subr.mxu0 0.0
    %1407 = vmatpush1.msra.mxu0 %v1293
    %1408 = vmatprep.subr.mxu0 0.0
    %1409 = vmatpush1.msra.mxu0 %v1292
    %1410 = vmatprep.subr.mxu0 0.0
    %1411 = vmatpush1.msra.mxu0 %v1291
    %1412 = vmatprep.subr.mxu0 0.0
    %1413 = vmatpush1.msra.mxu0 %v1290
    %1414 = vmatprep.subr.mxu0 0.0
    %1415 = vmatpush1.msra.mxu0 %v1289
    %1416 = vmatprep.subr.mxu0 0.0
    %1417 = vmatpush1.msra.mxu0 %v1288
    %1418 = vmatprep.subr.mxu0 0.0
    %1419 = vmatpush2.msra.mxu0 0.0
    %1420 = vmatprep.subr.mxu0 0.0
    %1421 = vmatpush2.msra.mxu0 0.0
    %1422 = vmatprep.subr.mxu0 0.0
    %1423 = vmatpush2.msra.mxu0 0.0
    %1424 = vmatprep.subr.mxu0 0.0
    %1425 = vmatpush2.msra.mxu0 0.0
    %1426 = vmatprep.subr.mxu0 0.0
    %1427 = vmatpush2.msra.mxu0 0.0
    %1428 = vmatprep.subr.mxu0 0.0
    %1429 = vmatpush2.msra.mxu0 0.0
    %1430 = vmatprep.subr.mxu0 0.0
    %1431 = vmatpush2.msra.mxu0 0.0
    %1432 = vmatprep.subr.mxu0 0.0
    %1433 = vmatpush2.msra.mxu0 0.0
    %1434 = vmatprep.subr.mxu0 0.0
    %1435 = vmatpush2.msra.mxu0 0.0
    %1436 = vmatprep.subr.mxu0 0.0
    %1437 = vmatpush2.msra.mxu0 0.0
    %1438 = vmatprep.subr.mxu0 0.0
    %1439 = vmatpush2.msra.mxu0 0.0
    %1440 = vmatprep.subr.mxu0 0.0
    %1441 = vmatpush2.msra.mxu0 0.0
    %1442 = vmatprep.subr.mxu0 0.0
    %1443 = vmatpush2.msra.mxu0 0.0
    %1444 = vmatprep.subr.mxu0 0.0
    %1445 = vmatpush2.msra.mxu0 0.0
    %1446 = vmatprep.subr.mxu0 0.0
    %1447 = vmatpush2.msra.mxu0 0.0
    %1448 = vmatprep.subr.mxu0 0.0
    %1449 = vmatpush2.msra.mxu0 0.0
    %1450 = vmatprep.mubr.f32.mxu0 0.0
    %1451 = vmatmul.mubr.f32.gmra.mxu0 %v1375
    %v1452 = vpop.f32.mrf.mxu0
    %v1453 = vadd.f32 %v1372, %v1452
    %v1454 = vpop.f32.mrf.mxu0
    %1455 = vmatprep.mubr.f32.mxu0 0.0
    %1456 = vmatmul.mubr.f32.gmra.mxu0 %v1378
    %v1457 = vpop.f32.mrf.mxu0
    %v1458 = vadd.f32 %v1372, %v1457
    %v1459 = vpop.f32.mrf.mxu0
    %1460 = vmatprep.mubr.f32.mxu0 0.0
    %1461 = vmatmul.mubr.f32.gmra.mxu0 %v1381
    %v1462 = vpop.f32.mrf.mxu0
    %v1463 = vadd.f32 %v1372, %v1462
    %v1464 = vpop.f32.mrf.mxu0
    %1465 = vmatprep.mubr.f32.mxu0 0.0
    %1466 = vmatmul.mubr.f32.gmra.mxu0 %v1384
    %v1467 = vpop.f32.mrf.mxu0
    %v1468 = vadd.f32 %v1372, %v1467
    %v1469 = vpop.f32.mrf.mxu0
    %1470 = vdwg.mxu0
    %v1471 = vadd.f32 %v1453, %v1059
    %v1472 = vadd.f32 %v1458, %v1060
    %v1473 = vadd.f32 %v1463, %v1061
    %v1474 = vadd.f32 %v1468, %v1062
    %v1475 = vld [vmem:[%s9] sm:$0xff]
    %v1476 = vld [vmem:[%s9 + $0x8] sm:$0xff]
    %v1477 = vld [vmem:[%s9 + $0x10] sm:$0xff]
    %v1478 = vld [vmem:[%s9 + $0x18] sm:$0xff]
    %v1479 = vld [vmem:[%s10] sm:$0x1]
    %v1481 = vlaneseq
    %v1482 = vshrl.u32 %v1481, 7
    %v1483 = vsub.s32 0, %v1482
    %v1484 = vrot.slane %v1479, %v1483
    %v1487 = vsel %vm297, %v1471, 0
    %v1490 = vsel %vm297, %v1472, 0
    %v1493 = vsel %vm297, %v1473, 0
    %v1496 = vsel %vm297, %v1474, 0
    %1498 = vmatprep.subr.mxu0 0.0
    %1499 = vmatpush1.msra.mxu0 0.0
    %1500 = vmatprep.subr.mxu0 0.0
    %1501 = vmatpush1.msra.mxu0 0.0
    %1502 = vmatprep.subr.mxu0 0.0
    %1503 = vmatpush1.msra.mxu0 0.0
    %1504 = vmatprep.subr.mxu0 0.0
    %1505 = vmatpush1.msra.mxu0 0.0
    %1506 = vmatprep.subr.mxu0 0.0
    %1507 = vmatpush1.msra.mxu0 0.0
    %1508 = vmatprep.subr.mxu0 0.0
    %1509 = vmatpush1.msra.mxu0 0.0
    %1510 = vmatprep.subr.mxu0 0.0
    %1511 = vmatpush1.msra.mxu0 0.0
    %1512 = vmatprep.subr.mxu0 0.0
    %1513 = vmatpush1.msra.mxu0 0.0
    %1514 = vmatprep.subr.mxu0 0.0
    %1515 = vmatpush1.msra.mxu0 0.0
    %1516 = vmatprep.subr.mxu0 0.0
    %1517 = vmatpush1.msra.mxu0 0.0
    %1518 = vmatprep.subr.mxu0 0.0
    %1519 = vmatpush1.msra.mxu0 0.0
    %1520 = vmatprep.subr.mxu0 0.0
    %1521 = vmatpush1.msra.mxu0 0.0
    %1522 = vmatprep.subr.mxu0 0.0
    %1523 = vmatpush1.msra.mxu0 %v1478
    %1524 = vmatprep.subr.mxu0 0.0
    %1525 = vmatpush1.msra.mxu0 %v1477
    %1526 = vmatprep.subr.mxu0 0.0
    %1527 = vmatpush1.msra.mxu0 %v1476
    %1528 = vmatprep.subr.mxu0 0.0
    %1529 = vmatpush1.msra.mxu0 %v1475
    %1530 = vmatprep.subr.mxu0 0.0
    %1531 = vmatpush2.msra.mxu0 0.0
    %1532 = vmatprep.subr.mxu0 0.0
    %1533 = vmatpush2.msra.mxu0 0.0
    %1534 = vmatprep.subr.mxu0 0.0
    %1535 = vmatpush2.msra.mxu0 0.0
    %1536 = vmatprep.subr.mxu0 0.0
    %1537 = vmatpush2.msra.mxu0 0.0
    %1538 = vmatprep.subr.mxu0 0.0
    %1539 = vmatpush2.msra.mxu0 0.0
    %1540 = vmatprep.subr.mxu0 0.0
    %1541 = vmatpush2.msra.mxu0 0.0
    %1542 = vmatprep.subr.mxu0 0.0
    %1543 = vmatpush2.msra.mxu0 0.0
    %1544 = vmatprep.subr.mxu0 0.0
    %1545 = vmatpush2.msra.mxu0 0.0
    %1546 = vmatprep.subr.mxu0 0.0
    %1547 = vmatpush2.msra.mxu0 0.0
    %1548 = vmatprep.subr.mxu0 0.0
    %1549 = vmatpush2.msra.mxu0 0.0
    %1550 = vmatprep.subr.mxu0 0.0
    %1551 = vmatpush2.msra.mxu0 0.0
    %1552 = vmatprep.subr.mxu0 0.0
    %1553 = vmatpush2.msra.mxu0 0.0
    %1554 = vmatprep.subr.mxu0 0.0
    %1555 = vmatpush2.msra.mxu0 0.0
    %1556 = vmatprep.subr.mxu0 0.0
    %1557 = vmatpush2.msra.mxu0 0.0
    %1558 = vmatprep.subr.mxu0 0.0
    %1559 = vmatpush2.msra.mxu0 0.0
    %1560 = vmatprep.subr.mxu0 0.0
    %1561 = vmatpush2.msra.mxu0 0.0
    %1562 = vmatprep.mubr.f32.mxu0 0.0
    %1563 = vmatmul.mubr.f32.gmra.mxu0 %v1487
    %v1564 = vpop.f32.mrf.mxu0
    %v1565 = vadd.f32 %v1484, %v1564
    %v1566 = vpop.f32.mrf.mxu0
    %1567 = vmatprep.mubr.f32.mxu0 0.0
    %1568 = vmatmul.mubr.f32.gmra.mxu0 %v1490
    %v1569 = vpop.f32.mrf.mxu0
    %v1570 = vadd.f32 %v1484, %v1569
    %v1571 = vpop.f32.mrf.mxu0
    %1572 = vmatprep.mubr.f32.mxu0 0.0
    %1573 = vmatmul.mubr.f32.gmra.mxu0 %v1493
    %v1574 = vpop.f32.mrf.mxu0
    %v1575 = vadd.f32 %v1484, %v1574
    %v1576 = vpop.f32.mrf.mxu0
    %1577 = vmatprep.mubr.f32.mxu0 0.0
    %1578 = vmatmul.mubr.f32.gmra.mxu0 %v1496
    %v1579 = vpop.f32.mrf.mxu0
    %v1580 = vadd.f32 %v1484, %v1579
    %v1581 = vpop.f32.mrf.mxu0
    %1582 = vdwg.mxu0
    %v1583 = vmul.f32 %v1471, 0.5
    %v1584 = vmul.f32 %v1472, 0.5
    %v1585 = vmul.f32 %v1473, 0.5
    %v1586 = vmul.f32 %v1474, 0.5
    %v1587 = vmul.f32 %v1471, 0.70710677
    %v1588 = vmul.f32 %v1472, 0.70710677
    %v1589 = vmul.f32 %v1473, 0.70710677
    %v1590 = vmul.f32 %v1474, 0.70710677
    %v1591 = verf.f32.pop %v1587
    %v1592 = verf.f32.pop %v1588
    %v1593 = verf.f32.pop %v1589
    %v1594 = verf.f32.pop %v1590
    %v1595 = vadd.f32 %v1591, 1.0
    %v1596 = vadd.f32 %v1592, 1.0
    %v1597 = vadd.f32 %v1593, 1.0
    %v1598 = vadd.f32 %v1594, 1.0
    %v1599 = vmul.f32 %v1583, %v1595
    %v1600 = vmul.f32 %v1584, %v1596
    %v1601 = vmul.f32 %v1585, %v1597
    %v1602 = vmul.f32 %v1586, %v1598
    %v1603 = vld [vmem:[%s5] sm:$0xff]
    %v1604 = vld [vmem:[%s5 + $0x8] sm:$0xff]
    %v1605 = vld [vmem:[%s5 + $0x10] sm:$0xff]
    %v1606 = vld [vmem:[%s5 + $0x18] sm:$0xff]
    %v1607 = vld [vmem:[%s5 + $0x20] sm:$0xff]
    %v1608 = vld [vmem:[%s5 + $0x28] sm:$0xff]
    %v1609 = vld [vmem:[%s5 + $0x30] sm:$0xff]
    %v1610 = vld [vmem:[%s5 + $0x38] sm:$0xff]
    %v1611 = vld [vmem:[%s5 + $0x40] sm:$0xff]
    %v1612 = vld [vmem:[%s5 + $0x48] sm:$0xff]
    %v1613 = vld [vmem:[%s5 + $0x50] sm:$0xff]
    %v1614 = vld [vmem:[%s5 + $0x58] sm:$0xff]
    %v1615 = vld [vmem:[%s6] sm:$0x1]
    %1620 = vrot.lane.b32.xlu0 %v1599, 32
    %v1621 = vpop.permute.xlu0 %1620
    %1622 = vrot.lane.b32.xlu0 %v1600, 32
    %v1623 = vpop.permute.xlu0 %1622
    %1624 = vrot.lane.b32.xlu0 %v1601, 32
    %v1625 = vpop.permute.xlu0 %1624
    %1626 = vrot.lane.b32.xlu0 %v1602, 32
    %v1627 = vpop.permute.xlu0 %1626
    %1633 = vrot.lane.b32.xlu0 %v1600, 64
    %v1634 = vpop.permute.xlu0 %1633
    %1635 = vrot.lane.b32.xlu0 0.0, 64
    %v1636 = vpop.permute.xlu0 %1635
    %1637 = vrot.lane.b32.xlu0 %v1602, 64
    %v1638 = vpop.permute.xlu0 %1637
    %v1642 = vsel %vm297, 0.0, %v1621
    %v1643 = vsel %vm297, %v1599, %v1623
    %v1644 = vsel %vm297, 0.0, %v1625
    %v1645 = vsel %vm297, %v1601, %v1627
    %v1646 = vsel %vm302, %v1642, %v1634
    %v1647 = vsel %vm302, %v1643, %v1636
    %v1648 = vsel %vm302, %v1644, %v1638
    %v1649 = vsel %vm302, %v1645, %v1636
    %v1651 = vlaneseq
    %v1652 = vshrl.u32 %v1651, 7
    %v1653 = vsub.s32 0, %v1652
    %v1654 = vrot.slane %v1615, %v1653
    %v1657 = vsel %vm313, %v1646, 0
    %v1660 = vsel %vm313, %v1647, 0
    %v1663 = vsel %vm313, %v1648, 0
    %v1666 = vsel %vm313, %v1649, 0
    %1668 = vmatprep.subr.mxu0 0.0
    %1669 = vmatpush1.msra.mxu0 0.0
    %1670 = vmatprep.subr.mxu0 0.0
    %1671 = vmatpush1.msra.mxu0 0.0
    %1672 = vmatprep.subr.mxu0 0.0
    %1673 = vmatpush1.msra.mxu0 0.0
    %1674 = vmatprep.subr.mxu0 0.0
    %1675 = vmatpush1.msra.mxu0 0.0
    %1676 = vmatprep.subr.mxu0 0.0
    %1677 = vmatpush1.msra.mxu0 %v1614
    %1678 = vmatprep.subr.mxu0 0.0
    %1679 = vmatpush1.msra.mxu0 %v1613
    %1680 = vmatprep.subr.mxu0 0.0
    %1681 = vmatpush1.msra.mxu0 %v1612
    %1682 = vmatprep.subr.mxu0 0.0
    %1683 = vmatpush1.msra.mxu0 %v1611
    %1684 = vmatprep.subr.mxu0 0.0
    %1685 = vmatpush1.msra.mxu0 %v1610
    %1686 = vmatprep.subr.mxu0 0.0
    %1687 = vmatpush1.msra.mxu0 %v1609
    %1688 = vmatprep.subr.mxu0 0.0
    %1689 = vmatpush1.msra.mxu0 %v1608
    %1690 = vmatprep.subr.mxu0 0.0
    %1691 = vmatpush1.msra.mxu0 %v1607
    %1692 = vmatprep.subr.mxu0 0.0
    %1693 = vmatpush1.msra.mxu0 %v1606
    %1694 = vmatprep.subr.mxu0 0.0
    %1695 = vmatpush1.msra.mxu0 %v1605
    %1696 = vmatprep.subr.mxu0 0.0
    %1697 = vmatpush1.msra.mxu0 %v1604
    %1698 = vmatprep.subr.mxu0 0.0
    %1699 = vmatpush1.msra.mxu0 %v1603
    %1700 = vmatprep.subr.mxu0 0.0
    %1701 = vmatpush2.msra.mxu0 0.0
    %1702 = vmatprep.subr.mxu0 0.0
    %1703 = vmatpush2.msra.mxu0 0.0
    %1704 = vmatprep.subr.mxu0 0.0
    %1705 = vmatpush2.msra.mxu0 0.0
    %1706 = vmatprep.subr.mxu0 0.0
    %1707 = vmatpush2.msra.mxu0 0.0
    %1708 = vmatprep.subr.mxu0 0.0
    %1709 = vmatpush2.msra.mxu0 0.0
    %1710 = vmatprep.subr.mxu0 0.0
    %1711 = vmatpush2.msra.mxu0 0.0
    %1712 = vmatprep.subr.mxu0 0.0
    %1713 = vmatpush2.msra.mxu0 0.0
    %1714 = vmatprep.subr.mxu0 0.0
    %1715 = vmatpush2.msra.mxu0 0.0
    %1716 = vmatprep.subr.mxu0 0.0
    %1717 = vmatpush2.msra.mxu0 0.0
    %1718 = vmatprep.subr.mxu0 0.0
    %1719 = vmatpush2.msra.mxu0 0.0
    %1720 = vmatprep.subr.mxu0 0.0
    %1721 = vmatpush2.msra.mxu0 0.0
    %1722 = vmatprep.subr.mxu0 0.0
    %1723 = vmatpush2.msra.mxu0 0.0
    %1724 = vmatprep.subr.mxu0 0.0
    %1725 = vmatpush2.msra.mxu0 0.0
    %1726 = vmatprep.subr.mxu0 0.0
    %1727 = vmatpush2.msra.mxu0 0.0
    %1728 = vmatprep.subr.mxu0 0.0
    %1729 = vmatpush2.msra.mxu0 0.0
    %1730 = vmatprep.subr.mxu0 0.0
    %1731 = vmatpush2.msra.mxu0 0.0
    %1732 = vmatprep.mubr.f32.mxu0 0.0
    %1733 = vmatmul.mubr.f32.gmra.mxu0 %v1657
    %v1734 = vpop.f32.mrf.mxu0
    %v1735 = vadd.f32 %v1654, %v1734
    %v1736 = vpop.f32.mrf.mxu0
    %1737 = vmatprep.mubr.f32.mxu0 0.0
    %1738 = vmatmul.mubr.f32.gmra.mxu0 %v1660
    %v1739 = vpop.f32.mrf.mxu0
    %v1740 = vadd.f32 %v1654, %v1739
    %v1741 = vpop.f32.mrf.mxu0
    %1742 = vmatprep.mubr.f32.mxu0 0.0
    %1743 = vmatmul.mubr.f32.gmra.mxu0 %v1663
    %v1744 = vpop.f32.mrf.mxu0
    %v1745 = vadd.f32 %v1654, %v1744
    %v1746 = vpop.f32.mrf.mxu0
    %1747 = vmatprep.mubr.f32.mxu0 0.0
    %1748 = vmatmul.mubr.f32.gmra.mxu0 %v1666
    %v1749 = vpop.f32.mrf.mxu0
    %v1750 = vadd.f32 %v1654, %v1749
    %v1751 = vpop.f32.mrf.mxu0
    %1752 = vdwg.mxu0
    %v1753 = vmul.f32 %v1735, 0.5
    %v1754 = vmul.f32 %v1740, 0.5
    %v1755 = vmul.f32 %v1745, 0.5
    %v1756 = vmul.f32 %v1750, 0.5
    %v1757 = vmul.f32 %v1735, 0.70710677
    %v1758 = vmul.f32 %v1740, 0.70710677
    %v1759 = vmul.f32 %v1745, 0.70710677
    %v1760 = vmul.f32 %v1750, 0.70710677
    %v1761 = verf.f32.pop %v1757
    %v1762 = verf.f32.pop %v1758
    %v1763 = verf.f32.pop %v1759
    %v1764 = verf.f32.pop %v1760
    %v1765 = vadd.f32 %v1761, 1.0
    %v1766 = vadd.f32 %v1762, 1.0
    %v1767 = vadd.f32 %v1763, 1.0
    %v1768 = vadd.f32 %v1764, 1.0
    %v1769 = vmul.f32 %v1753, %v1765
    %v1770 = vmul.f32 %v1754, %v1766
    %v1771 = vmul.f32 %v1755, %v1767
    %v1772 = vmul.f32 %v1756, %v1768
    %v1773 = vld [vmem:[%s7] sm:$0xff]
    %v1774 = vld [vmem:[%s7 + $0x8] sm:$0xff]
    %v1775 = vld [vmem:[%s7 + $0x10] sm:$0xff]
    %v1776 = vld [vmem:[%s7 + $0x18] sm:$0xff]
    %v1777 = vld [vmem:[%s7 + $0x20] sm:$0xff]
    %v1778 = vld [vmem:[%s7 + $0x28] sm:$0xff]
    %v1779 = vld [vmem:[%s8] sm:$0x1]
    %1784 = vrot.lane.b32.xlu0 %v1769, 16
    %v1785 = vpop.permute.xlu0 %1784
    %1786 = vrot.lane.b32.xlu0 %v1770, 16
    %v1787 = vpop.permute.xlu0 %1786
    %1788 = vrot.lane.b32.xlu0 %v1771, 16
    %v1789 = vpop.permute.xlu0 %1788
    %1790 = vrot.lane.b32.xlu0 %v1772, 16
    %v1791 = vpop.permute.xlu0 %1790
    %1796 = vrot.lane.b32.xlu0 %v1770, 32
    %v1797 = vpop.permute.xlu0 %1796
    %1798 = vrot.lane.b32.xlu0 0.0, 32
    %v1799 = vpop.permute.xlu0 %1798
    %1800 = vrot.lane.b32.xlu0 %v1772, 32
    %v1801 = vpop.permute.xlu0 %1800
    %vm1805 = vcmask 130048
    %v1806 = vsel %vm1805, 0.0, %v1785
    %v1807 = vsel %vm1805, %v1769, %v1787
    %v1808 = vsel %vm1805, 0.0, %v1789
    %v1809 = vsel %vm1805, %v1771, %v1791
    %v1810 = vsel %vm297, %v1806, %v1797
    %v1811 = vsel %vm297, %v1807, %v1799
    %v1812 = vsel %vm297, %v1808, %v1801
    %v1813 = vsel %vm297, %v1809, %v1799
    %v1815 = vlaneseq
    %v1816 = vshrl.u32 %v1815, 7
    %v1817 = vsub.s32 0, %v1816
    %v1818 = vrot.slane %v1779, %v1817
    %vm1820 = vcmask 392192
    %v1822 = vsel %vm1820, %v1810, 0
    %v1825 = vsel %vm1820, %v1811, 0
    %v1828 = vsel %vm1820, %v1812, 0
    %v1831 = vsel %vm1820, %v1813, 0
    %1833 = vmatprep.subr.mxu0 0.0
    %1834 = vmatpush1.msra.mxu0 0.0
    %1835 = vmatprep.subr.mxu0 0.0
    %1836 = vmatpush1.msra.mxu0 0.0
    %1837 = vmatprep.subr.mxu0 0.0
    %1838 = vmatpush1.msra.mxu0 0.0
    %1839 = vmatprep.subr.mxu0 0.0
    %1840 = vmatpush1.msra.mxu0 0.0
    %1841 = vmatprep.subr.mxu0 0.0
    %1842 = vmatpush1.msra.mxu0 0.0
    %1843 = vmatprep.subr.mxu0 0.0
    %1844 = vmatpush1.msra.mxu0 0.0
    %1845 = vmatprep.subr.mxu0 0.0
    %1846 = vmatpush1.msra.mxu0 0.0
    %1847 = vmatprep.subr.mxu0 0.0
    %1848 = vmatpush1.msra.mxu0 0.0
    %1849 = vmatprep.subr.mxu0 0.0
    %1850 = vmatpush1.msra.mxu0 0.0
    %1851 = vmatprep.subr.mxu0 0.0
    %1852 = vmatpush1.msra.mxu0 0.0
    %1853 = vmatprep.subr.mxu0 0.0
    %1854 = vmatpush1.msra.mxu0 %v1778
    %1855 = vmatprep.subr.mxu0 0.0
    %1856 = vmatpush1.msra.mxu0 %v1777
    %1857 = vmatprep.subr.mxu0 0.0
    %1858 = vmatpush1.msra.mxu0 %v1776
    %1859 = vmatprep.subr.mxu0 0.0
    %1860 = vmatpush1.msra.mxu0 %v1775
    %1861 = vmatprep.subr.mxu0 0.0
    %1862 = vmatpush1.msra.mxu0 %v1774
    %1863 = vmatprep.subr.mxu0 0.0
    %1864 = vmatpush1.msra.mxu0 %v1773
    %1865 = vmatprep.subr.mxu0 0.0
    %1866 = vmatpush2.msra.mxu0 0.0
    %1867 = vmatprep.subr.mxu0 0.0
    %1868 = vmatpush2.msra.mxu0 0.0
    %1869 = vmatprep.subr.mxu0 0.0
    %1870 = vmatpush2.msra.mxu0 0.0
    %1871 = vmatprep.subr.mxu0 0.0
    %1872 = vmatpush2.msra.mxu0 0.0
    %1873 = vmatprep.subr.mxu0 0.0
    %1874 = vmatpush2.msra.mxu0 0.0
    %1875 = vmatprep.subr.mxu0 0.0
    %1876 = vmatpush2.msra.mxu0 0.0
    %1877 = vmatprep.subr.mxu0 0.0
    %1878 = vmatpush2.msra.mxu0 0.0
    %1879 = vmatprep.subr.mxu0 0.0
    %1880 = vmatpush2.msra.mxu0 0.0
    %1881 = vmatprep.subr.mxu0 0.0
    %1882 = vmatpush2.msra.mxu0 0.0
    %1883 = vmatprep.subr.mxu0 0.0
    %1884 = vmatpush2.msra.mxu0 0.0
    %1885 = vmatprep.subr.mxu0 0.0
    %1886 = vmatpush2.msra.mxu0 0.0
    %1887 = vmatprep.subr.mxu0 0.0
    %1888 = vmatpush2.msra.mxu0 0.0
    %1889 = vmatprep.subr.mxu0 0.0
    %1890 = vmatpush2.msra.mxu0 0.0
    %1891 = vmatprep.subr.mxu0 0.0
    %1892 = vmatpush2.msra.mxu0 0.0
    %1893 = vmatprep.subr.mxu0 0.0
    %1894 = vmatpush2.msra.mxu0 0.0
    %1895 = vmatprep.subr.mxu0 0.0
    %1896 = vmatpush2.msra.mxu0 0.0
    %1897 = vmatprep.mubr.f32.mxu0 0.0
    %1898 = vmatmul.mubr.f32.gmra.mxu0 %v1822
    %v1899 = vpop.f32.mrf.mxu0
    %v1900 = vadd.f32 %v1818, %v1899
    %v1901 = vpop.f32.mrf.mxu0
    %1902 = vmatprep.mubr.f32.mxu0 0.0
    %1903 = vmatmul.mubr.f32.gmra.mxu0 %v1825
    %v1904 = vpop.f32.mrf.mxu0
    %v1905 = vadd.f32 %v1818, %v1904
    %v1906 = vpop.f32.mrf.mxu0
    %1907 = vmatprep.mubr.f32.mxu0 0.0
    %1908 = vmatmul.mubr.f32.gmra.mxu0 %v1828
    %v1909 = vpop.f32.mrf.mxu0
    %v1910 = vadd.f32 %v1818, %v1909
    %v1911 = vpop.f32.mrf.mxu0
    %1912 = vmatprep.mubr.f32.mxu0 0.0
    %1913 = vmatmul.mubr.f32.gmra.mxu0 %v1831
    %v1914 = vpop.f32.mrf.mxu0
    %v1915 = vadd.f32 %v1818, %v1914
    %v1916 = vpop.f32.mrf.mxu0
    %1917 = vdwg.mxu0
    %v1918 = vadd.f32 %v1900, %v1565
    %v1919 = vadd.f32 %v1905, %v1570
    %v1920 = vadd.f32 %v1910, %v1575
    %v1921 = vadd.f32 %v1915, %v1580
    %1922 = vst.msk [vmem:[#allocation2] sm:$0xff] %vm1805, %v1918
    %1923 = vst.msk [vmem:[#allocation2 + $0x8] sm:$0xff] %vm1805, %v1919
    %1924 = vst.msk [vmem:[#allocation2 + $0x10] sm:$0xff] %vm1805, %v1920
    %1925 = vst.msk [vmem:[#allocation2 + $0x18] sm:$0xff] %vm1805, %v1921
    // Predicated region
    $region46: #{tpu_custom_call.1} parent=1 // pred_check
      _
    $region47: #{tpu_custom_call.1} parent=1 // pred_check_branch
      %1927 = sbr.rel (0) target = $region49
    $region48: #{tpu_custom_call.1} parent=1 // pred_region
      %s1929 = ssub.s32 512, 512
      %1930 = vsyncadd [#allocation3], %s1929
      %s1931 = sshll.u32 [#allocation2], 4
      %s1932 = int_to_ptr.vmem [resolvable:$true] %s1931
      %1937 = dma.vmem_to_hbm [thread:$0]  %s1932, 512, %s11, [#allocation3], 128, 128, 8
    $region49: #{tpu_custom_call.1} parent=1 // pred_fallthru
      _
    // Predicated region
    $region50: #{tpu_custom_call.1} parent=1 // pred_check
      _
    $region51: #{tpu_custom_call.1} parent=1 // pred_check_branch
      %1939 = sbr.rel (0) target = $region53
    $region52: #{tpu_custom_call.1} parent=1 // pred_region
      %1940 = dma.done [#allocation3], 512
    $region53: #{tpu_custom_call.1} parent=1 // pred_fallthru
      _
    %1941 = vsyncpa [#allocation3], 1

</llo_original>
